<compile_context>
chip_gen: v6e
topology: v6e:2x2x1
jax: 0.10.0
libtpu: 0.0.40
codegen_flags: <defaults>
</compile_context>

<pallas_src>
import numpy as np

import jax
import jax.numpy as jnp
from jax.experimental import pallas as pl
from jax.experimental.pallas import tpu as pltpu


# ----------------------- module configuration (mirrors __init__) -----------------------
SIZE = (8, 16, 16)                  # (T, H, W) of the full feature volume
CHANNELS = 16                       # C == sum of per-level grid channels
GRID_LEVEL = 2
GRID_SIZE = (4, 8, 8, 8)            # (T_grid, H_grid, W_grid, C_grid)
GRID_LEVEL_SCALE = (2.0, 2.0, 2.0, 1.0)
GRID_INIT_SCALE = 0.5


def _compute_grid_sizes():
    T_g, H_g, W_g, C_g = GRID_SIZE
    Ts, Hs, Ws, Cs = GRID_LEVEL_SCALE
    sizes = []
    for i in range(GRID_LEVEL):
        sizes.append((int(T_g / Ts ** i), int(H_g / Hs ** i),
                      int(W_g / Ws ** i), int(C_g / Cs ** i)))
    return sizes


GRID_SIZES = _compute_grid_sizes()
assert sum(s[3] for s in GRID_SIZES) == CHANNELS


# ----------------------- host-side (numpy) interpolation operators ----------------------
def interp_matrix_np(s_out, s_in):
    """1-D linear-interpolation matrix, half-pixel centers (== F.interpolate,
    mode='trilinear', align_corners=False, per axis).  Built with numpy so it is
    a trace-time constant (never re-materialized as an XLA subgraph)."""
    d = np.arange(s_out, dtype=np.float64)
    src = (d + 0.5) * (float(s_in) / float(s_out)) - 0.5
    src = np.maximum(src, 0.0)
    i0 = np.minimum(np.floor(src).astype(np.int64), s_in - 1)
    i1 = np.minimum(i0 + 1, s_in - 1)
    w1 = src - i0
    w0 = 1.0 - w1
    m = np.zeros((s_out, s_in), dtype=np.float64)
    np.add.at(m, (np.arange(s_out), i0), w0)
    np.add.at(m, (np.arange(s_out), i1), w1)
    return m.astype(np.float32)


def _build_operators(idx_max, padding, patch, padded_patch):
    """Per-level operators for the separable expansion (all numpy constants).

    Returns:
      a_ops[i] : [TP*HP, Ti*Hi]        kron(At_pad, Ah_pad); zero rows = boundary mask.
      b_ops[i] : [NW, Wi*Ci, wp*C]     per-W-patch Aw window composed with the
                                       channel-scatter identity (c = c_off + ci).
    """
    T, H, W = SIZE
    C = CHANNELS
    pt, ph, pw = patch
    tp, hp, wp = padded_patch
    pad_t, pad_h, pad_w = padding
    NW = idx_max[2]

    a_ops, b_ops = [], []
    c_off = 0
    for (Ti, Hi, Wi, Ci) in GRID_SIZES:
        At = np.pad(interp_matrix_np(T, Ti), ((pad_t, pad_t), (0, 0)))   # [TP, Ti]
        Ah = np.pad(interp_matrix_np(H, Hi), ((pad_h, pad_h), (0, 0)))   # [HP, Hi]
        Aw = np.pad(interp_matrix_np(W, Wi), ((pad_w, pad_w), (0, 0)))   # [W+2pw, Wi]
        a_ops.append(np.kron(At, Ah).astype(np.float32))                 # [TP*HP, Ti*Hi]

        # window rows of Aw per W-patch index: padded W coord = iw*pw + j
        rows = np.arange(NW)[:, None] * pw + np.arange(wp)[None, :]      # [NW, wp]
        Aw_win = Aw[rows]                                                # [NW, wp, Wi]
        eye = np.zeros((Ci, C), np.float32)
        eye[np.arange(Ci), c_off + np.arange(Ci)] = 1.0
        # B[iw, wi*Ci+ci, j*C+c] = Aw_win[iw, j, wi] * eye[ci, c]
        B = np.einsum('njw,cd->nwcjd', Aw_win, eye).reshape(NW, Wi * Ci, wp * C)
        b_ops.append(B.astype(np.float32))
        c_off += Ci
    return a_ops, b_ops


# ----------------------- Pallas kernel 1: separable trilinear expansion -----------------
def _make_expand_kernel(n_levels, nw):
    def kernel(*refs):
        a_refs = refs[0:n_levels]                 # [TP*HP, Ti*Hi]
        g_refs = refs[n_levels:2 * n_levels]      # [Ti*Hi, Wi*Ci]  (learned params)
        b_refs = refs[2 * n_levels:3 * n_levels]  # [NW, Wi*Ci, wp*C]
        o_ref = refs[3 * n_levels]                # [NW, TP*HP, wp*C]

        # (T,H) expansion per level: tiny MXU matmuls on the ~9 KB grid params.
        ys = [jnp.dot(a_refs[i][...], g_refs[i][...],
                      preferred_element_type=jnp.float32)
              for i in range(n_levels)]
        # W expansion + channel scatter, lane-dense output (wp*C lanes).
        for iw in range(nw):
            acc = jnp.dot(ys[0], b_refs[0][iw], preferred_element_type=jnp.float32)
            for i in range(1, n_levels):
                acc = acc + jnp.dot(ys[i], b_refs[i][iw],
                                    preferred_element_type=jnp.float32)
            o_ref[iw, :, :] = acc
    return kernel


# ----------------------- Pallas kernel 2: batched per-patch gather ----------------------
def _make_gather_kernel(bn, pt, ph, tp, hp, TP):
    h_aligned = (ph % 8 == 0)   # static: h-slice start lands on a sublane boundary

    def kernel(idx_ref, tab_ref, out_ref):
        base = pl.program_id(0) * bn
        for k in range(bn):                      # static unroll: BN patches per step
            it = idx_ref[3 * (base + k) + 0]
            ih = idx_ref[3 * (base + k) + 1]
            iw = idx_ref[3 * (base + k) + 2]
            # Table leading axis is (iw*TP + t_pad); the whole patch box is one
            # contiguous 3-D slice (padding/masking baked into the table).
            row0 = iw * TP + it * pt
            h0 = ih * ph
            if h_aligned:
                h0 = pl.multiple_of(h0, 8)
            out_ref[k, :, :, :] = tab_ref[pl.ds(row0, tp), pl.ds(h0, hp), :]
    return kernel


# ----------------------- forward (== HiNeRVEncoding.forward) ----------------------------
def hinerv_encoding_forward(grid_params, idx, idx_max, padding):
    """Equivalent of HiNeRVEncoding.forward(idx, idx_max, padding) -> [N, tp, hp, wp, C]."""
    T, H, W = SIZE
    C = CHANNELS
    N = idx.shape[0]
    n_levels = len(GRID_SIZES)
    patch = tuple(SIZE[d] // idx_max[d] for d in range(3))
    padded_patch = tuple(patch[d] + 2 * padding[d] for d in range(3))
    pt, ph, pw = patch
    tp, hp, wp = padded_patch
    TP, HP = T + 2 * padding[0], H + 2 * padding[1]
    NW = idx_max[2]

    # --- host constants (trace-time, numpy) -------------------------------------------
    a_ops, b_ops = _build_operators(idx_max, padding, patch, padded_patch)
    a_args = [jnp.asarray(a) for a in a_ops]
    b_args = [jnp.asarray(b) for b in b_ops]
    # pure row-major reshape of the learned params (free): [Ti*Hi*Wi, Ci] -> [Ti*Hi, Wi*Ci]
    g_args = [grid_params[i].reshape(GRID_SIZES[i][0] * GRID_SIZES[i][1],
                                     GRID_SIZES[i][2] * GRID_SIZES[i][3]).astype(jnp.float32)
              for i in range(n_levels)]

    # --- kernel 1: separable expansion -> lane-dense padded + masked encoding table ----
    table3 = pl.pallas_call(
        _make_expand_kernel(n_levels, NW),
        out_shape=jax.ShapeDtypeStruct((NW, TP * HP, wp * C), jnp.float32),
    )(*a_args, *g_args, *b_args)
    # free row-major split: rows (iw, t, h) -> [(iw,t), h, (j,c)]
    table = table3.reshape(NW * TP, HP, wp * C)          # ~230 KiB, fits any VMEM

    # --- kernel 2: BN patches per grid step, table resident in VMEM --------------------
    BN = max(1, min(8, N))
    N_pad = ((N + BN - 1) // BN) * BN
    idx_i32 = idx.astype(jnp.int32)
    if N_pad != N:
        idx_i32 = jnp.pad(idx_i32, ((0, N_pad - N), (0, 0)))   # (0,0,0) -> valid dummy
    idx_flat = idx_i32.reshape(-1)                             # 1-D scalar prefetch

    grid_spec = pltpu.PrefetchScalarGridSpec(
        num_scalar_prefetch=1,
        grid=(N_pad // BN,),
        in_specs=[pl.BlockSpec((NW * TP, HP, wp * C), lambda b, idx_ref: (0, 0, 0))],
        out_specs=pl.BlockSpec((BN, tp, hp, wp * C), lambda b, idx_ref: (b, 0, 0, 0)),
    )
    out = pl.pallas_call(
        _make_gather_kernel(BN, pt, ph, tp, hp, TP),
        grid_spec=grid_spec,
        out_shape=jax.ShapeDtypeStruct((N_pad, tp, hp, wp * C), jnp.float32),
        compiler_params=pltpu.CompilerParams(dimension_semantics=("parallel",)),
    )(idx_flat, table)
    if N_pad != N:
        out = out[:N]
    return out.reshape(N, tp, hp, wp, C)


# ----------------------- pure-JAX reference (for self-check) ----------------------------
def reference_forward(grid_params, idx, idx_max, padding):
    T, H, W = SIZE
    C = CHANNELS
    patch = tuple(SIZE[d] // idx_max[d] for d in range(3))
    padded = tuple(patch[d] + 2 * padding[d] for d in range(3))
    hi_prec = jax.lax.Precision.HIGHEST
    enc_levels = []
    for i, g in enumerate(grid_params):
        x = g.reshape(GRID_SIZES[i])
        Ti, Hi, Wi, Ci = x.shape
        At = jnp.asarray(interp_matrix_np(T, Ti))
        Ah = jnp.asarray(interp_matrix_np(H, Hi))
        Aw = jnp.asarray(interp_matrix_np(W, Wi))
        y = jnp.einsum('ti,ihwc->thwc', At, x, precision=hi_prec)
        y = jnp.einsum('hj,tjwc->thwc', Ah, y, precision=hi_prec)
        y = jnp.einsum('wk,thkc->thwc', Aw, y, precision=hi_prec)
        enc_levels.append(y)
    enc = jnp.concatenate(enc_levels, axis=-1).reshape(T * H * W, C)

    px_idx, px_mask = [], []
    for d in range(3):
        lin = (idx[:, d][:, None] * patch[d]
               + jnp.arange(-padding[d], patch[d] + padding[d])[None, :])
        px_mask.append(jnp.logical_and(lin >= 0, lin < SIZE[d]).astype(jnp.float32))
        px_idx.append(jnp.clip(lin, 0, SIZE[d] - 1))
    flat = (px_idx[0][:, :, None, None] * SIZE[1] * SIZE[2]
            + px_idx[1][:, None, :, None] * SIZE[2]
            + px_idx[2][:, None, None, :]).reshape(-1)
    mask = (px_mask[0][:, :, None, None, None]
            * px_mask[1][:, None, :, None, None]
            * px_mask[2][:, None, None, :, None]).reshape(-1, 1)
    out = (mask * jnp.take(enc, flat, axis=0)).reshape((idx.shape[0],) + padded + (C,))
    return out


# ----------------------------------------- main -----------------------------------------
if __name__ == "__main__":
    key = jax.random.PRNGKey(0)
    grid_params = []
    for (Ti, Hi, Wi, Ci) in GRID_SIZES:
        key, sub = jax.random.split(key)
        grid_params.append(
            GRID_INIT_SCALE * jax.random.normal(sub, (Ti * Hi * Wi, Ci), jnp.float32))

    idx = jnp.array([[0, 0, 0], [1, 1, 1]], dtype=jnp.int32)   # [N, 3]
    idx_max = (2, 2, 2)
    padding = (1, 1, 1)

    fwd = jax.jit(hinerv_encoding_forward, static_argnames=("idx_max", "padding"))
    out = fwd(grid_params, idx, idx_max=idx_max, padding=padding)
    out = jax.block_until_ready(out)

    expected_shape = (idx.shape[0],
                      SIZE[0] // idx_max[0] + 2 * padding[0],
                      SIZE[1] // idx_max[1] + 2 * padding[1],
                      SIZE[2] // idx_max[2] + 2 * padding[2],
                      CHANNELS)
    assert out.shape == expected_shape, (out.shape, expected_shape)

    ref = reference_forward(grid_params, idx, idx_max, padding)
    assert bool(jnp.allclose(out, ref, atol=1e-2, rtol=1e-2)), "mismatch vs reference"

    print("KERNEL_OK")
</pallas_src>

<mosaic_0001>
module attributes {stable_mosaic.version = 11 : i64} {
  func.func @kernel(%arg0: i32, %arg1: memref<6xi32, #tpu.memory_space<smem>>, %arg2: memref<20x18x160xf32, #tpu.memory_space<vmem>>, %arg3: memref<2x6x10x160xf32, #tpu.memory_space<vmem>>) attributes {dimension_semantics = [#tpu.dimension_semantics<parallel>], iteration_bounds = array<i64: 1>, scalar_prefetch = 1 : i64, scratch_operands = 0 : i64, tpu.core_type = #tpu.core_type<tc>, window_params = [{pipeline_mode = #tpu.pipeline_mode<synchronous>, transform_indices = @transform_0, window_bounds = array<i64: 20, 18, 160>}, {transform_indices = @transform_1, window_bounds = array<i64: 2, 6, 10, 160>}]} {
    %c2_i32 = arith.constant 2 : i32
    %0 = arith.muli %arg0, %c2_i32 : i32
    %c0_i32 = arith.constant 0 : i32
    %1 = arith.addi %0, %c0_i32 : i32
    %c3_i32 = arith.constant 3 : i32
    %2 = arith.muli %c3_i32, %1 : i32
    %c0_i32_0 = arith.constant 0 : i32
    %3 = arith.addi %2, %c0_i32_0 : i32
    %4 = arith.index_cast %3 : i32 to index
    %5 = memref.load %arg1[%4] : memref<6xi32, #tpu.memory_space<smem>>
    %c0_i32_1 = arith.constant 0 : i32
    %6 = arith.addi %0, %c0_i32_1 : i32
    %c3_i32_2 = arith.constant 3 : i32
    %7 = arith.muli %c3_i32_2, %6 : i32
    %c1_i32 = arith.constant 1 : i32
    %8 = arith.addi %7, %c1_i32 : i32
    %9 = arith.index_cast %8 : i32 to index
    %10 = memref.load %arg1[%9] : memref<6xi32, #tpu.memory_space<smem>>
    %c0_i32_3 = arith.constant 0 : i32
    %11 = arith.addi %0, %c0_i32_3 : i32
    %c3_i32_4 = arith.constant 3 : i32
    %12 = arith.muli %c3_i32_4, %11 : i32
    %c2_i32_5 = arith.constant 2 : i32
    %13 = arith.addi %12, %c2_i32_5 : i32
    %14 = arith.index_cast %13 : i32 to index
    %15 = memref.load %arg1[%14] : memref<6xi32, #tpu.memory_space<smem>>
    %c10_i32 = arith.constant 10 : i32
    %16 = arith.muli %15, %c10_i32 : i32
    %c4_i32 = arith.constant 4 : i32
    %17 = arith.muli %5, %c4_i32 : i32
    %18 = arith.addi %16, %17 : i32
    %c8_i32 = arith.constant 8 : i32
    %19 = arith.muli %10, %c8_i32 : i32
    %20 = tpu.assume_multiple %19, 8 : i32
    %21 = arith.index_cast %18 : i32 to index
    %22 = arith.index_cast %20 : i32 to index
    %c0 = arith.constant 0 : index
    %23 = vector.load %arg2[%21, %22, %c0] : memref<20x18x160xf32, #tpu.memory_space<vmem>>, vector<6x10x160xf32>
    %c0_6 = arith.constant 0 : index
    %c0_7 = arith.constant 0 : index
    %c0_8 = arith.constant 0 : index
    %c0_9 = arith.constant 0 : index
    %24 = vector.load %arg3[%c0_6, %c0_7, %c0_8, %c0_9] : memref<2x6x10x160xf32, #tpu.memory_space<vmem>>, vector<1x6x10x160xf32>
    %25 = vector.shape_cast %24 : vector<1x6x10x160xf32> to vector<6x10x160xf32>
    %26 = vector.shape_cast %23 : vector<6x10x160xf32> to vector<1x6x10x160xf32>
    tpu.vector_store %arg3[%c0_6, %c0_7, %c0_8, %c0_9], %26 {strides = array<i32>} : memref<2x6x10x160xf32, #tpu.memory_space<vmem>>, vector<1x6x10x160xf32>,
    %c1_i32_10 = arith.constant 1 : i32
    %27 = arith.addi %0, %c1_i32_10 : i32
    %c3_i32_11 = arith.constant 3 : i32
    %28 = arith.muli %c3_i32_11, %27 : i32
    %c0_i32_12 = arith.constant 0 : i32
    %29 = arith.addi %28, %c0_i32_12 : i32
    %30 = arith.index_cast %29 : i32 to index
    %31 = memref.load %arg1[%30] : memref<6xi32, #tpu.memory_space<smem>>
    %c1_i32_13 = arith.constant 1 : i32
    %32 = arith.addi %0, %c1_i32_13 : i32
    %c3_i32_14 = arith.constant 3 : i32
    %33 = arith.muli %c3_i32_14, %32 : i32
    %c1_i32_15 = arith.constant 1 : i32
    %34 = arith.addi %33, %c1_i32_15 : i32
    %35 = arith.index_cast %34 : i32 to index
    %36 = memref.load %arg1[%35] : memref<6xi32, #tpu.memory_space<smem>>
    %c1_i32_16 = arith.constant 1 : i32
    %37 = arith.addi %0, %c1_i32_16 : i32
    %c3_i32_17 = arith.constant 3 : i32
    %38 = arith.muli %c3_i32_17, %37 : i32
    %c2_i32_18 = arith.constant 2 : i32
    %39 = arith.addi %38, %c2_i32_18 : i32
    %40 = arith.index_cast %39 : i32 to index
    %41 = memref.load %arg1[%40] : memref<6xi32, #tpu.memory_space<smem>>
    %c10_i32_19 = arith.constant 10 : i32
    %42 = arith.muli %41, %c10_i32_19 : i32
    %c4_i32_20 = arith.constant 4 : i32
    %43 = arith.muli %31, %c4_i32_20 : i32
    %44 = arith.addi %42, %43 : i32
    %c8_i32_21 = arith.constant 8 : i32
    %45 = arith.muli %36, %c8_i32_21 : i32
    %46 = tpu.assume_multiple %45, 8 : i32
    %47 = arith.index_cast %44 : i32 to index
    %48 = arith.index_cast %46 : i32 to index
    %c0_22 = arith.constant 0 : index
    %49 = vector.load %arg2[%47, %48, %c0_22] : memref<20x18x160xf32, #tpu.memory_space<vmem>>, vector<6x10x160xf32>
    %c1 = arith.constant 1 : index
    %c0_23 = arith.constant 0 : index
    %c0_24 = arith.constant 0 : index
    %c0_25 = arith.constant 0 : index
    %50 = vector.load %arg3[%c1, %c0_23, %c0_24, %c0_25] : memref<2x6x10x160xf32, #tpu.memory_space<vmem>>, vector<1x6x10x160xf32>
    %51 = vector.shape_cast %50 : vector<1x6x10x160xf32> to vector<6x10x160xf32>
    %52 = vector.shape_cast %49 : vector<6x10x160xf32> to vector<1x6x10x160xf32>
    tpu.vector_store %arg3[%c1, %c0_23, %c0_24, %c0_25], %52 {strides = array<i32>} : memref<2x6x10x160xf32, #tpu.memory_space<vmem>>, vector<1x6x10x160xf32>,
    return
  }
  func.func @transform_0(%arg0: i32, %arg1: memref<6xi32, #tpu.memory_space<smem>>) -> (i32, i32, i32) {
    %c0_i32 = arith.constant 0 : i32
    %c0_i32_0 = arith.constant 0 : i32
    %c0_i32_1 = arith.constant 0 : i32
    %c0_i32_2 = arith.constant 0 : i32
    return %c0_i32, %c0_i32_0, %c0_i32_1 : i32, i32, i32
  }
  func.func @transform_1(%arg0: i32, %arg1: memref<6xi32, #tpu.memory_space<smem>>) -> (i32, i32, i32, i32) {
    %c0_i32 = arith.constant 0 : i32
    %c0_i32_0 = arith.constant 0 : i32
    %c0_i32_1 = arith.constant 0 : i32
    %c0_i32_2 = arith.constant 0 : i32
    return %arg0, %c0_i32, %c0_i32_0, %c0_i32_1 : i32, i32, i32, i32
  }
}

module attributes {stable_mosaic.version = 11 : i64} {
  func.func @kernel(%arg0: memref<180x32xf32, #tpu.memory_space<vmem>>, %arg1: memref<180x8xf32, #tpu.memory_space<vmem>>, %arg2: memref<32x64xf32, #tpu.memory_space<vmem>>, %arg3: memref<8x32xf32, #tpu.memory_space<vmem>>, %arg4: memref<2x64x160xf32, #tpu.memory_space<vmem>>, %arg5: memref<2x32x160xf32, #tpu.memory_space<vmem>>, %arg6: memref<2x180x160xf32, #tpu.memory_space<vmem>>) attributes {dimension_semantics = [], scalar_prefetch = 0 : i64, scratch_operands = 0 : i64, tpu.core_type = #tpu.core_type<tc>} {
    %c0 = arith.constant 0 : index
    %c0_0 = arith.constant 0 : index
    %0 = vector.load %arg0[%c0, %c0_0] : memref<180x32xf32, #tpu.memory_space<vmem>>, vector<180x32xf32>
    %c0_1 = arith.constant 0 : index
    %c0_2 = arith.constant 0 : index
    %1 = vector.load %arg2[%c0_1, %c0_2] : memref<32x64xf32, #tpu.memory_space<vmem>>, vector<32x64xf32>
    %cst = arith.constant dense<0.000000e+00> : vector<180x64xf32>
    %2 = tpu.matmul %0, %1, %cst {dimension_numbers = #tpu.dot_dimension_numbers<[1], [0], [0], [1], [0, 0, 1, 1], [], []>} : vector<180x32xf32>, vector<32x64xf32>, vector<180x64xf32> -> vector<180x64xf32>
    %c0_3 = arith.constant 0 : index
    %c0_4 = arith.constant 0 : index
    %3 = vector.load %arg1[%c0_3, %c0_4] : memref<180x8xf32, #tpu.memory_space<vmem>>, vector<180x8xf32>
    %c0_5 = arith.constant 0 : index
    %c0_6 = arith.constant 0 : index
    %4 = vector.load %arg3[%c0_5, %c0_6] : memref<8x32xf32, #tpu.memory_space<vmem>>, vector<8x32xf32>
    %cst_7 = arith.constant dense<0.000000e+00> : vector<180x32xf32>
    %5 = tpu.matmul %3, %4, %cst_7 {dimension_numbers = #tpu.dot_dimension_numbers<[1], [0], [0], [1], [0, 0, 1, 1], [], []>} : vector<180x8xf32>, vector<8x32xf32>, vector<180x32xf32> -> vector<180x32xf32>
    %c0_8 = arith.constant 0 : index
    %c0_9 = arith.constant 0 : index
    %c0_10 = arith.constant 0 : index
    %6 = vector.load %arg4[%c0_8, %c0_9, %c0_10] : memref<2x64x160xf32, #tpu.memory_space<vmem>>, vector<1x64x160xf32>
    %7 = vector.shape_cast %6 : vector<1x64x160xf32> to vector<64x160xf32>
    %cst_11 = arith.constant dense<0.000000e+00> : vector<180x160xf32>
    %8 = tpu.matmul %2, %7, %cst_11 {dimension_numbers = #tpu.dot_dimension_numbers<[1], [0], [0], [1], [0, 0, 1, 1], [], []>} : vector<180x64xf32>, vector<64x160xf32>, vector<180x160xf32> -> vector<180x160xf32>
    %c0_12 = arith.constant 0 : index
    %c0_13 = arith.constant 0 : index
    %c0_14 = arith.constant 0 : index
    %9 = vector.load %arg5[%c0_12, %c0_13, %c0_14] : memref<2x32x160xf32, #tpu.memory_space<vmem>>, vector<1x32x160xf32>
    %10 = vector.shape_cast %9 : vector<1x32x160xf32> to vector<32x160xf32>
    %cst_15 = arith.constant dense<0.000000e+00> : vector<180x160xf32>
    %11 = tpu.matmul %5, %10, %cst_15 {dimension_numbers = #tpu.dot_dimension_numbers<[1], [0], [0], [1], [0, 0, 1, 1], [], []>} : vector<180x32xf32>, vector<32x160xf32>, vector<180x160xf32> -> vector<180x160xf32>
    %12 = arith.addf %8, %11 : vector<180x160xf32>
    %c0_16 = arith.constant 0 : index
    %c0_17 = arith.constant 0 : index
    %c0_18 = arith.constant 0 : index
    %13 = vector.load %arg6[%c0_16, %c0_17, %c0_18] : memref<2x180x160xf32, #tpu.memory_space<vmem>>, vector<1x180x160xf32>
    %14 = vector.shape_cast %13 : vector<1x180x160xf32> to vector<180x160xf32>
    %15 = vector.shape_cast %12 : vector<180x160xf32> to vector<1x180x160xf32>
    tpu.vector_store %arg6[%c0_16, %c0_17, %c0_18], %15 {strides = array<i32>} : memref<2x180x160xf32, #tpu.memory_space<vmem>>, vector<1x180x160xf32>,
    %c1 = arith.constant 1 : index
    %c0_19 = arith.constant 0 : index
    %c0_20 = arith.constant 0 : index
    %16 = vector.load %arg4[%c1, %c0_19, %c0_20] : memref<2x64x160xf32, #tpu.memory_space<vmem>>, vector<1x64x160xf32>
    %17 = vector.shape_cast %16 : vector<1x64x160xf32> to vector<64x160xf32>
    %cst_21 = arith.constant dense<0.000000e+00> : vector<180x160xf32>
    %18 = tpu.matmul %2, %17, %cst_21 {dimension_numbers = #tpu.dot_dimension_numbers<[1], [0], [0], [1], [0, 0, 1, 1], [], []>} : vector<180x64xf32>, vector<64x160xf32>, vector<180x160xf32> -> vector<180x160xf32>
    %c1_22 = arith.constant 1 : index
    %c0_23 = arith.constant 0 : index
    %c0_24 = arith.constant 0 : index
    %19 = vector.load %arg5[%c1_22, %c0_23, %c0_24] : memref<2x32x160xf32, #tpu.memory_space<vmem>>, vector<1x32x160xf32>
    %20 = vector.shape_cast %19 : vector<1x32x160xf32> to vector<32x160xf32>
    %cst_25 = arith.constant dense<0.000000e+00> : vector<180x160xf32>
    %21 = tpu.matmul %5, %20, %cst_25 {dimension_numbers = #tpu.dot_dimension_numbers<[1], [0], [0], [1], [0, 0, 1, 1], [], []>} : vector<180x32xf32>, vector<32x160xf32>, vector<180x160xf32> -> vector<180x160xf32>
    %22 = arith.addf %18, %21 : vector<180x160xf32>
    %c1_26 = arith.constant 1 : index
    %c0_27 = arith.constant 0 : index
    %c0_28 = arith.constant 0 : index
    %23 = vector.load %arg6[%c1_26, %c0_27, %c0_28] : memref<2x180x160xf32, #tpu.memory_space<vmem>>, vector<1x180x160xf32>
    %24 = vector.shape_cast %23 : vector<1x180x160xf32> to vector<180x160xf32>
    %25 = vector.shape_cast %22 : vector<180x160xf32> to vector<1x180x160xf32>
    tpu.vector_store %arg6[%c1_26, %c0_27, %c0_28], %25 {strides = array<i32>} : memref<2x180x160xf32, #tpu.memory_space<vmem>>, vector<1x180x160xf32>,
    return
  }
}

</mosaic_0001>

<llo_original>
// kernel: hinerv_encoding_forward.3
$region0: #{hinerv_encoding_forward.3}
  #allocation0 [shape = 'u32[]', space=smem, size = 0x4, offset = 0x4, fixed_abs, tag = 'smem constant byte address 0x4 - core index']
  #allocation1 [shape = 'u32[144,128]{1,0:T(1,128)}', space=vmem, size = 0x12000, scoped, tag = 'internal scratch']
  #allocation2 [shape = 's32[1]{0}', space=sflag, size = 0x4, scoped, tag = 'scoped memory for hinerv_encoding_forward.3']
  #allocation3 [shape = 'u8[512]{0}', space=smem, size = 0x200, scoped, tag = 'prefetched SMEM operand 0']
  %s0 = inlined_call_operand.vmem [shape: s32[6], index: 0, kind: input, shape index: {}]
  %s1 = inlined_call_operand.vmem [shape: f32[20,18,160], index: 1, kind: input, shape index: {}]
  %s2 = inlined_call_operand.vmem [shape: f32[2,6,10,160], index: 2, kind: output, shape index: {}]
  %s3 = sld [smem:[#allocation0]]
  $region14: #{hinerv_encoding_forward.3} parent=0
    _
  %s5 = ssub.s32 1, %s3
  %s6 = scalar_select 0, %s5, %s3
  %s7 = sshll.u32 %s0, 4
  %s8 = int_to_ptr.vmem [resolvable:$true] %s7
  %10 = dma.vmem_to_smem %s8, 16, [#allocation3], [#allocation2]
  %11 = dma.done [#allocation2], 16
  %12 = sfence
  // Predicated region
  $region2: #{hinerv_encoding_forward.3} parent=0 // pred_check
    _
  $region3: #{hinerv_encoding_forward.3} parent=0 // pred_check_branch
    %14 = sbr.rel (0) target = $region5
  $region4: #{hinerv_encoding_forward.3} parent=0 // pred_region
    _
  $region5: #{hinerv_encoding_forward.3} parent=0 // pred_fallthru
    _
  %s15 = smul.u32 0, 2
  %s16 = smul.u32 0, 6
  %s17 = sld [smem:[#allocation3 + %s16]]
  %s18 = sadd.s32 %s16, 1
  %s19 = sld [smem:[#allocation3 + %s18]]
  %s20 = sadd.s32 %s16, 2
  %s21 = sld [smem:[#allocation3 + %s20]]
  %s22 = smul.u32 %s21, 10
  %s23 = smul.u32 %s17, 4
  %s24 = sadd.s32 %s22, %s23
  %s25 = smul.u32 %s19, 8
  %s26 = sshra.s32 %s25, 3
  %s27 = sand.u32 %s25, 7
  %s28 = smul.u32 %s26, 2
  %s29 = smul.u32 %s24, 6
  %s30 = sadd.s32 %s28, %s29
  %s31 = smul.addr %s30, 8
  %s32 = scalar_lea.vmem %s1, %s31
  %v33 = vld [vmem:[%s32] sm:$0xff]
  %v34 = vld [vmem:[%s32 + $0x8] sm:$0xff]
  %v35 = vld [vmem:[%s32 + $0x10] sm:$0x3]
  %v36 = vld [vmem:[%s32 + $0x18] sm:$0x3]
  %v37 = vld [vmem:[%s32 + $0x30] sm:$0xff]
  %v38 = vld [vmem:[%s32 + $0x38] sm:$0xff]
  %v39 = vld [vmem:[%s32 + $0x40] sm:$0x3]
  %v40 = vld [vmem:[%s32 + $0x48] sm:$0x3]
  %v41 = vld [vmem:[%s32 + $0x60] sm:$0xff]
  %v42 = vld [vmem:[%s32 + $0x68] sm:$0xff]
  %v43 = vld [vmem:[%s32 + $0x70] sm:$0x3]
  %v44 = vld [vmem:[%s32 + $0x78] sm:$0x3]
  %v45 = vld [vmem:[%s32 + $0x90] sm:$0xff]
  %v46 = vld [vmem:[%s32 + $0x98] sm:$0xff]
  %v47 = vld [vmem:[%s32 + $0xa0] sm:$0x3]
  %v48 = vld [vmem:[%s32 + $0xa8] sm:$0x3]
  %v49 = vld [vmem:[%s32 + $0xc0] sm:$0xff]
  %v50 = vld [vmem:[%s32 + $0xc8] sm:$0xff]
  %v51 = vld [vmem:[%s32 + $0xd0] sm:$0x3]
  %v52 = vld [vmem:[%s32 + $0xd8] sm:$0x3]
  %v53 = vld [vmem:[%s32 + $0xf0] sm:$0xff]
  %v54 = vld [vmem:[%s32 + $0xf8] sm:$0xff]
  %v55 = vld [vmem:[%s32 + $0x100] sm:$0x3]
  %v56 = vld [vmem:[%s32 + $0x108] sm:$0x3]
  %57 = vst [vmem:[%s2] sm:$0xff] %v33
  %vm58 = vcmask 261120
  %59 = vst.msk [vmem:[%s2 + $0x8] sm:$0xff] %vm58, %v34
  %60 = vst [vmem:[%s2 + $0x10] sm:$0x3] %v35
  %vm61 = vcmask 254976
  %62 = vst.msk [vmem:[%s2 + $0x18] sm:$0x3] %vm61, %v36
  %63 = vst [vmem:[%s2 + $0x20] sm:$0xff] %v37
  %64 = vst.msk [vmem:[%s2 + $0x28] sm:$0xff] %vm58, %v38
  %65 = vst [vmem:[%s2 + $0x30] sm:$0x3] %v39
  %66 = vst.msk [vmem:[%s2 + $0x38] sm:$0x3] %vm61, %v40
  %67 = vst [vmem:[%s2 + $0x40] sm:$0xff] %v41
  %68 = vst.msk [vmem:[%s2 + $0x48] sm:$0xff] %vm58, %v42
  %69 = vst [vmem:[%s2 + $0x50] sm:$0x3] %v43
  %70 = vst.msk [vmem:[%s2 + $0x58] sm:$0x3] %vm61, %v44
  %71 = vst [vmem:[%s2 + $0x60] sm:$0xff] %v45
  %72 = vst.msk [vmem:[%s2 + $0x68] sm:$0xff] %vm58, %v46
  %73 = vst [vmem:[%s2 + $0x70] sm:$0x3] %v47
  %74 = vst.msk [vmem:[%s2 + $0x78] sm:$0x3] %vm61, %v48
  %75 = vst [vmem:[%s2 + $0x80] sm:$0xff] %v49
  %76 = vst.msk [vmem:[%s2 + $0x88] sm:$0xff] %vm58, %v50
  %77 = vst [vmem:[%s2 + $0x90] sm:$0x3] %v51
  %78 = vst.msk [vmem:[%s2 + $0x98] sm:$0x3] %vm61, %v52
  %79 = vst [vmem:[%s2 + $0xa0] sm:$0xff] %v53
  %80 = vst.msk [vmem:[%s2 + $0xa8] sm:$0xff] %vm58, %v54
  %81 = vst [vmem:[%s2 + $0xb0] sm:$0x3] %v55
  %82 = vst.msk [vmem:[%s2 + $0xb8] sm:$0x3] %vm61, %v56
  %s83 = sadd.s32 %s15, 1
  %s84 = smul.u32 %s83, 3
  %s85 = sld [smem:[#allocation3 + %s84]]
  %s86 = sadd.s32 %s84, 1
  %s87 = sld [smem:[#allocation3 + %s86]]
  %s88 = sadd.s32 %s84, 2
  %s89 = sld [smem:[#allocation3 + %s88]]
  %s90 = smul.u32 %s89, 10
  %s91 = smul.u32 %s85, 4
  %s92 = sadd.s32 %s90, %s91
  %s93 = smul.u32 %s87, 8
  %s94 = sshra.s32 %s93, 3
  %s95 = sand.u32 %s93, 7
  %s96 = smul.u32 %s94, 2
  %s97 = smul.u32 %s92, 6
  %s98 = sadd.s32 %s96, %s97
  %s99 = smul.addr %s98, 8
  %s100 = scalar_lea.vmem %s1, %s99
  %v101 = vld [vmem:[%s100] sm:$0xff]
  %v102 = vld [vmem:[%s100 + $0x8] sm:$0xff]
  %v103 = vld [vmem:[%s100 + $0x10] sm:$0x3]
  %v104 = vld [vmem:[%s100 + $0x18] sm:$0x3]
  %v105 = vld [vmem:[%s100 + $0x30] sm:$0xff]
  %v106 = vld [vmem:[%s100 + $0x38] sm:$0xff]
  %v107 = vld [vmem:[%s100 + $0x40] sm:$0x3]
  %v108 = vld [vmem:[%s100 + $0x48] sm:$0x3]
  %v109 = vld [vmem:[%s100 + $0x60] sm:$0xff]
  %v110 = vld [vmem:[%s100 + $0x68] sm:$0xff]
  %v111 = vld [vmem:[%s100 + $0x70] sm:$0x3]
  %v112 = vld [vmem:[%s100 + $0x78] sm:$0x3]
  %v113 = vld [vmem:[%s100 + $0x90] sm:$0xff]
  %v114 = vld [vmem:[%s100 + $0x98] sm:$0xff]
  %v115 = vld [vmem:[%s100 + $0xa0] sm:$0x3]
  %v116 = vld [vmem:[%s100 + $0xa8] sm:$0x3]
  %v117 = vld [vmem:[%s100 + $0xc0] sm:$0xff]
  %v118 = vld [vmem:[%s100 + $0xc8] sm:$0xff]
  %v119 = vld [vmem:[%s100 + $0xd0] sm:$0x3]
  %v120 = vld [vmem:[%s100 + $0xd8] sm:$0x3]
  %v121 = vld [vmem:[%s100 + $0xf0] sm:$0xff]
  %v122 = vld [vmem:[%s100 + $0xf8] sm:$0xff]
  %v123 = vld [vmem:[%s100 + $0x100] sm:$0x3]
  %v124 = vld [vmem:[%s100 + $0x108] sm:$0x3]
  %s125 = scalar_lea.vmem %s2, 192
  %126 = vst [vmem:[%s125] sm:$0xff] %v101
  %127 = vst.msk [vmem:[%s125 + $0x8] sm:$0xff] %vm58, %v102
  %128 = vst [vmem:[%s125 + $0x10] sm:$0x3] %v103
  %129 = vst.msk [vmem:[%s125 + $0x18] sm:$0x3] %vm61, %v104
  %130 = vst [vmem:[%s125 + $0x20] sm:$0xff] %v105
  %131 = vst.msk [vmem:[%s125 + $0x28] sm:$0xff] %vm58, %v106
  %132 = vst [vmem:[%s125 + $0x30] sm:$0x3] %v107
  %133 = vst.msk [vmem:[%s125 + $0x38] sm:$0x3] %vm61, %v108
  %134 = vst [vmem:[%s125 + $0x40] sm:$0xff] %v109
  %135 = vst.msk [vmem:[%s125 + $0x48] sm:$0xff] %vm58, %v110
  %136 = vst [vmem:[%s125 + $0x50] sm:$0x3] %v111
  %137 = vst.msk [vmem:[%s125 + $0x58] sm:$0x3] %vm61, %v112
  %138 = vst [vmem:[%s125 + $0x60] sm:$0xff] %v113
  %139 = vst.msk [vmem:[%s125 + $0x68] sm:$0xff] %vm58, %v114
  %140 = vst [vmem:[%s125 + $0x70] sm:$0x3] %v115
  %141 = vst.msk [vmem:[%s125 + $0x78] sm:$0x3] %vm61, %v116
  %142 = vst [vmem:[%s125 + $0x80] sm:$0xff] %v117
  %143 = vst.msk [vmem:[%s125 + $0x88] sm:$0xff] %vm58, %v118
  %144 = vst [vmem:[%s125 + $0x90] sm:$0x3] %v119
  %145 = vst.msk [vmem:[%s125 + $0x98] sm:$0x3] %vm61, %v120
  %146 = vst [vmem:[%s125 + $0xa0] sm:$0xff] %v121
  %147 = vst.msk [vmem:[%s125 + $0xa8] sm:$0xff] %vm58, %v122
  %148 = vst [vmem:[%s125 + $0xb0] sm:$0x3] %v123
  %149 = vst.msk [vmem:[%s125 + $0xb8] sm:$0x3] %vm61, %v124
  // Predicated region
  $region6: #{hinerv_encoding_forward.3} parent=0 // pred_check
    _
  $region7: #{hinerv_encoding_forward.3} parent=0 // pred_check_branch
    %151 = sbr.rel (0) target = $region9
  $region8: #{hinerv_encoding_forward.3} parent=0 // pred_region
    _
  $region9: #{hinerv_encoding_forward.3} parent=0 // pred_fallthru
    _
  // Predicated region
  $region10: #{hinerv_encoding_forward.3} parent=0 // pred_check
    _
  $region11: #{hinerv_encoding_forward.3} parent=0 // pred_check_branch
    %153 = sbr.rel (0) target = $region13
  $region12: #{hinerv_encoding_forward.3} parent=0 // pred_region
    _
  $region13: #{hinerv_encoding_forward.3} parent=0 // pred_fallthru
    _

// kernel: hinerv_encoding_forward.2
$region0: #{hinerv_encoding_forward.2}
  #allocation0 [shape = 'u32[]', space=smem, size = 0x4, offset = 0x4, fixed_abs, tag = 'smem constant byte address 0x4 - core index']
  #allocation1 [shape = 'u32[144,128]{1,0:T(1,128)}', space=vmem, size = 0x12000, scoped, tag = 'internal scratch']
  %s0 = inlined_call_operand.vmem [shape: f32[180,32], index: 0, kind: input, shape index: {}]
  %s1 = inlined_call_operand.vmem [shape: f32[180,8], index: 1, kind: input, shape index: {}]
  %s2 = inlined_call_operand.vmem [shape: f32[32,64], index: 2, kind: input, shape index: {}]
  %s3 = inlined_call_operand.vmem [shape: f32[8,32], index: 3, kind: input, shape index: {}]
  %s4 = inlined_call_operand.vmem [shape: f32[2,64,160], index: 4, kind: input, shape index: {}]
  %s5 = inlined_call_operand.hbm [shape: f32[2,32,160], index: 5, kind: input, shape index: {}]
  %s6 = inlined_call_operand.vmem [shape: f32[2,180,160], index: 6, kind: output, shape index: {}]
  %s7 = sld [smem:[#allocation0]]
  $region38: #{hinerv_encoding_forward.2} parent=0
    _
  %s9 = ssub.s32 1, %s7
  %s10 = scalar_select 0, %s9, %s7
  $region1: #{hinerv_encoding_forward.2} parent=0
    #allocation2 [shape = 'u8[65536]{0}', space=vmem, size = 0x10000, scoped, tag = 'input window, operand 5, single buffered']
    #allocation3 [shape = 's32[1]{0}', space=sflag, size = 0x4, scoped, tag = 'scoped memory for hinerv_encoding_forward.2']
    %11 = vsyncpa [#allocation3], 0
    // Predicated region
    $region2: #{hinerv_encoding_forward.2} parent=1 // pred_check
      _
    $region3: #{hinerv_encoding_forward.2} parent=1 // pred_check_branch
      %13 = sbr.rel (0) target = $region5
    $region4: #{hinerv_encoding_forward.2} parent=1 // pred_region
      _
    $region5: #{hinerv_encoding_forward.2} parent=1 // pred_fallthru
      _
    // Predicated region
    $region6: #{hinerv_encoding_forward.2} parent=1 // pred_check
      _
    $region7: #{hinerv_encoding_forward.2} parent=1 // pred_check_branch
      %15 = sbr.rel (0) target = $region9
    $region8: #{hinerv_encoding_forward.2} parent=1 // pred_region
      _
    $region9: #{hinerv_encoding_forward.2} parent=1 // pred_fallthru
      _
    // Predicated region
    $region10: #{hinerv_encoding_forward.2} parent=1 // pred_check
      _
    $region11: #{hinerv_encoding_forward.2} parent=1 // pred_check_branch
      %17 = sbr.rel (0) target = $region13
    $region12: #{hinerv_encoding_forward.2} parent=1 // pred_region
      _
    $region13: #{hinerv_encoding_forward.2} parent=1 // pred_fallthru
      _
    // Predicated region
    $region14: #{hinerv_encoding_forward.2} parent=1 // pred_check
      _
    $region15: #{hinerv_encoding_forward.2} parent=1 // pred_check_branch
      %19 = sbr.rel (0) target = $region17
    $region16: #{hinerv_encoding_forward.2} parent=1 // pred_region
      _
    $region17: #{hinerv_encoding_forward.2} parent=1 // pred_fallthru
      _
    // Predicated region
    $region18: #{hinerv_encoding_forward.2} parent=1 // pred_check
      _
    $region19: #{hinerv_encoding_forward.2} parent=1 // pred_check_branch
      %21 = sbr.rel (0) target = $region21
    $region20: #{hinerv_encoding_forward.2} parent=1 // pred_region
      _
    $region21: #{hinerv_encoding_forward.2} parent=1 // pred_fallthru
      _
    // Predicated region
    $region22: #{hinerv_encoding_forward.2} parent=1 // pred_check
      _
    $region23: #{hinerv_encoding_forward.2} parent=1 // pred_check_branch
      %23 = sbr.rel (0) target = $region25
    $region24: #{hinerv_encoding_forward.2} parent=1 // pred_region
      %s25 = ssub.s32 2048, 2048
      %26 = vsyncadd [#allocation3], %s25
      %s27 = sshll.u32 [#allocation2], 4
      %s28 = int_to_ptr.vmem [resolvable:$true] %s27
      %33 = dma.hbm_to_vmem [thread:$0]  %s5, 2048, %s28, [#allocation3], 256, 256, 16
    $region25: #{hinerv_encoding_forward.2} parent=1 // pred_fallthru
      _
    // Predicated region
    $region26: #{hinerv_encoding_forward.2} parent=1 // pred_check
      _
    $region27: #{hinerv_encoding_forward.2} parent=1 // pred_check_branch
      %35 = sbr.rel (0) target = $region29
    $region28: #{hinerv_encoding_forward.2} parent=1 // pred_region
      %36 = dma.done [#allocation3], 2048
    $region29: #{hinerv_encoding_forward.2} parent=1 // pred_fallthru
      _
    %v37 = vld [vmem:[%s0] sm:$0xff]
    %v38 = vld [vmem:[%s0 + $0x8] sm:$0xff]
    %v39 = vld [vmem:[%s0 + $0x10] sm:$0xff]
    %v40 = vld [vmem:[%s0 + $0x18] sm:$0xff]
    %v41 = vld [vmem:[%s0 + $0x20] sm:$0xff]
    %v42 = vld [vmem:[%s0 + $0x28] sm:$0xff]
    %v43 = vld [vmem:[%s0 + $0x30] sm:$0xff]
    %v44 = vld [vmem:[%s0 + $0x38] sm:$0xff]
    %v45 = vld [vmem:[%s0 + $0x40] sm:$0xff]
    %v46 = vld [vmem:[%s0 + $0x48] sm:$0xff]
    %v47 = vld [vmem:[%s0 + $0x50] sm:$0xff]
    %v48 = vld [vmem:[%s0 + $0x58] sm:$0xff]
    %v49 = vld [vmem:[%s0 + $0x60] sm:$0xff]
    %v50 = vld [vmem:[%s0 + $0x68] sm:$0xff]
    %v51 = vld [vmem:[%s0 + $0x70] sm:$0xff]
    %v52 = vld [vmem:[%s0 + $0x78] sm:$0xff]
    %v53 = vld [vmem:[%s0 + $0x80] sm:$0xff]
    %v54 = vld [vmem:[%s0 + $0x88] sm:$0xff]
    %v55 = vld [vmem:[%s0 + $0x90] sm:$0xff]
    %v56 = vld [vmem:[%s0 + $0x98] sm:$0xff]
    %v57 = vld [vmem:[%s0 + $0xa0] sm:$0xff]
    %v58 = vld [vmem:[%s0 + $0xa8] sm:$0xff]
    %v59 = vld [vmem:[%s0 + $0xb0] sm:$0xf]
    %v60 = vld [vmem:[%s2] sm:$0xff]
    %v61 = vld [vmem:[%s2 + $0x8] sm:$0xff]
    %v62 = vld [vmem:[%s2 + $0x10] sm:$0xff]
    %v63 = vld [vmem:[%s2 + $0x18] sm:$0xff]
    %vm64 = vcmask 261120
    %v66 = vsel %vm64, %v37, 0
    %v69 = vsel %vm64, %v38, 0
    %v72 = vsel %vm64, %v39, 0
    %v75 = vsel %vm64, %v40, 0
    %v78 = vsel %vm64, %v41, 0
    %v81 = vsel %vm64, %v42, 0
    %v84 = vsel %vm64, %v43, 0
    %v87 = vsel %vm64, %v44, 0
    %v90 = vsel %vm64, %v45, 0
    %v93 = vsel %vm64, %v46, 0
    %v96 = vsel %vm64, %v47, 0
    %v99 = vsel %vm64, %v48, 0
    %v102 = vsel %vm64, %v49, 0
    %v105 = vsel %vm64, %v50, 0
    %v108 = vsel %vm64, %v51, 0
    %v111 = vsel %vm64, %v52, 0
    %v114 = vsel %vm64, %v53, 0
    %v117 = vsel %vm64, %v54, 0
    %v120 = vsel %vm64, %v55, 0
    %v123 = vsel %vm64, %v56, 0
    %v126 = vsel %vm64, %v57, 0
    %v129 = vsel %vm64, %v58, 0
    %v132 = vsel %vm64, %v59, 0
    %134 = vmatprep.subr.mxu0 0.0
    %135 = vmatpush1.msra.mxu0 0.0
    %136 = vmatprep.subr.mxu0 0.0
    %137 = vmatpush1.msra.mxu0 0.0
    %138 = vmatprep.subr.mxu0 0.0
    %139 = vmatpush1.msra.mxu0 0.0
    %140 = vmatprep.subr.mxu0 0.0
    %141 = vmatpush1.msra.mxu0 0.0
    %142 = vmatprep.subr.mxu0 0.0
    %143 = vmatpush1.msra.mxu0 0.0
    %144 = vmatprep.subr.mxu0 0.0
    %145 = vmatpush1.msra.mxu0 0.0
    %146 = vmatprep.subr.mxu0 0.0
    %147 = vmatpush1.msra.mxu0 0.0
    %148 = vmatprep.subr.mxu0 0.0
    %149 = vmatpush1.msra.mxu0 0.0
    %150 = vmatprep.subr.mxu0 0.0
    %151 = vmatpush1.msra.mxu0 0.0
    %152 = vmatprep.subr.mxu0 0.0
    %153 = vmatpush1.msra.mxu0 0.0
    %154 = vmatprep.subr.mxu0 0.0
    %155 = vmatpush1.msra.mxu0 0.0
    %156 = vmatprep.subr.mxu0 0.0
    %157 = vmatpush1.msra.mxu0 0.0
    %158 = vmatprep.subr.mxu0 0.0
    %159 = vmatpush1.msra.mxu0 %v63
    %160 = vmatprep.subr.mxu0 0.0
    %161 = vmatpush1.msra.mxu0 %v62
    %162 = vmatprep.subr.mxu0 0.0
    %163 = vmatpush1.msra.mxu0 %v61
    %164 = vmatprep.subr.mxu0 0.0
    %165 = vmatpush1.msra.mxu0 %v60
    %166 = vmatprep.subr.mxu0 0.0
    %167 = vmatpush2.msra.mxu0 0.0
    %168 = vmatprep.subr.mxu0 0.0
    %169 = vmatpush2.msra.mxu0 0.0
    %170 = vmatprep.subr.mxu0 0.0
    %171 = vmatpush2.msra.mxu0 0.0
    %172 = vmatprep.subr.mxu0 0.0
    %173 = vmatpush2.msra.mxu0 0.0
    %174 = vmatprep.subr.mxu0 0.0
    %175 = vmatpush2.msra.mxu0 0.0
    %176 = vmatprep.subr.mxu0 0.0
    %177 = vmatpush2.msra.mxu0 0.0
    %178 = vmatprep.subr.mxu0 0.0
    %179 = vmatpush2.msra.mxu0 0.0
    %180 = vmatprep.subr.mxu0 0.0
    %181 = vmatpush2.msra.mxu0 0.0
    %182 = vmatprep.subr.mxu0 0.0
    %183 = vmatpush2.msra.mxu0 0.0
    %184 = vmatprep.subr.mxu0 0.0
    %185 = vmatpush2.msra.mxu0 0.0
    %186 = vmatprep.subr.mxu0 0.0
    %187 = vmatpush2.msra.mxu0 0.0
    %188 = vmatprep.subr.mxu0 0.0
    %189 = vmatpush2.msra.mxu0 0.0
    %190 = vmatprep.subr.mxu0 0.0
    %191 = vmatpush2.msra.mxu0 0.0
    %192 = vmatprep.subr.mxu0 0.0
    %193 = vmatpush2.msra.mxu0 0.0
    %194 = vmatprep.subr.mxu0 0.0
    %195 = vmatpush2.msra.mxu0 0.0
    %196 = vmatprep.subr.mxu0 0.0
    %197 = vmatpush2.msra.mxu0 0.0
    %198 = vmatprep.mubr.f32.mxu0 0.0
    %199 = vmatmul.mubr.f32.gmra.mxu0 %v66
    %v200 = vpop.f32.mrf.mxu0
    %v201 = vadd.f32 0.0, %v200
    %v202 = vpop.f32.mrf.mxu0
    %203 = vmatprep.mubr.f32.mxu0 0.0
    %204 = vmatmul.mubr.f32.gmra.mxu0 %v69
    %v205 = vpop.f32.mrf.mxu0
    %v206 = vadd.f32 0.0, %v205
    %v207 = vpop.f32.mrf.mxu0
    %208 = vmatprep.mubr.f32.mxu0 0.0
    %209 = vmatmul.mubr.f32.gmra.mxu0 %v72
    %v210 = vpop.f32.mrf.mxu0
    %v211 = vadd.f32 0.0, %v210
    %v212 = vpop.f32.mrf.mxu0
    %213 = vmatprep.mubr.f32.mxu0 0.0
    %214 = vmatmul.mubr.f32.gmra.mxu0 %v75
    %v215 = vpop.f32.mrf.mxu0
    %v216 = vadd.f32 0.0, %v215
    %v217 = vpop.f32.mrf.mxu0
    %218 = vmatprep.mubr.f32.mxu0 0.0
    %219 = vmatmul.mubr.f32.gmra.mxu0 %v78
    %v220 = vpop.f32.mrf.mxu0
    %v221 = vadd.f32 0.0, %v220
    %v222 = vpop.f32.mrf.mxu0
    %223 = vmatprep.mubr.f32.mxu0 0.0
    %224 = vmatmul.mubr.f32.gmra.mxu0 %v81
    %v225 = vpop.f32.mrf.mxu0
    %v226 = vadd.f32 0.0, %v225
    %v227 = vpop.f32.mrf.mxu0
    %228 = vmatprep.mubr.f32.mxu0 0.0
    %229 = vmatmul.mubr.f32.gmra.mxu0 %v84
    %v230 = vpop.f32.mrf.mxu0
    %v231 = vadd.f32 0.0, %v230
    %v232 = vpop.f32.mrf.mxu0
    %233 = vmatprep.mubr.f32.mxu0 0.0
    %234 = vmatmul.mubr.f32.gmra.mxu0 %v87
    %v235 = vpop.f32.mrf.mxu0
    %v236 = vadd.f32 0.0, %v235
    %v237 = vpop.f32.mrf.mxu0
    %238 = vmatprep.mubr.f32.mxu0 0.0
    %239 = vmatmul.mubr.f32.gmra.mxu0 %v90
    %v240 = vpop.f32.mrf.mxu0
    %v241 = vadd.f32 0.0, %v240
    %v242 = vpop.f32.mrf.mxu0
    %243 = vmatprep.mubr.f32.mxu0 0.0
    %244 = vmatmul.mubr.f32.gmra.mxu0 %v93
    %v245 = vpop.f32.mrf.mxu0
    %v246 = vadd.f32 0.0, %v245
    %v247 = vpop.f32.mrf.mxu0
    %248 = vmatprep.mubr.f32.mxu0 0.0
    %249 = vmatmul.mubr.f32.gmra.mxu0 %v96
    %v250 = vpop.f32.mrf.mxu0
    %v251 = vadd.f32 0.0, %v250
    %v252 = vpop.f32.mrf.mxu0
    %253 = vmatprep.mubr.f32.mxu0 0.0
    %254 = vmatmul.mubr.f32.gmra.mxu0 %v99
    %v255 = vpop.f32.mrf.mxu0
    %v256 = vadd.f32 0.0, %v255
    %v257 = vpop.f32.mrf.mxu0
    %258 = vmatprep.mubr.f32.mxu0 0.0
    %259 = vmatmul.mubr.f32.gmra.mxu0 %v102
    %v260 = vpop.f32.mrf.mxu0
    %v261 = vadd.f32 0.0, %v260
    %v262 = vpop.f32.mrf.mxu0
    %263 = vmatprep.mubr.f32.mxu0 0.0
    %264 = vmatmul.mubr.f32.gmra.mxu0 %v105
    %v265 = vpop.f32.mrf.mxu0
    %v266 = vadd.f32 0.0, %v265
    %v267 = vpop.f32.mrf.mxu0
    %268 = vmatprep.mubr.f32.mxu0 0.0
    %269 = vmatmul.mubr.f32.gmra.mxu0 %v108
    %v270 = vpop.f32.mrf.mxu0
    %v271 = vadd.f32 0.0, %v270
    %v272 = vpop.f32.mrf.mxu0
    %273 = vmatprep.mubr.f32.mxu0 0.0
    %274 = vmatmul.mubr.f32.gmra.mxu0 %v111
    %v275 = vpop.f32.mrf.mxu0
    %v276 = vadd.f32 0.0, %v275
    %v277 = vpop.f32.mrf.mxu0
    %278 = vmatprep.mubr.f32.mxu0 0.0
    %279 = vmatmul.mubr.f32.gmra.mxu0 %v114
    %v280 = vpop.f32.mrf.mxu0
    %v281 = vadd.f32 0.0, %v280
    %v282 = vpop.f32.mrf.mxu0
    %283 = vmatprep.mubr.f32.mxu0 0.0
    %284 = vmatmul.mubr.f32.gmra.mxu0 %v117
    %v285 = vpop.f32.mrf.mxu0
    %v286 = vadd.f32 0.0, %v285
    %v287 = vpop.f32.mrf.mxu0
    %288 = vmatprep.mubr.f32.mxu0 0.0
    %289 = vmatmul.mubr.f32.gmra.mxu0 %v120
    %v290 = vpop.f32.mrf.mxu0
    %v291 = vadd.f32 0.0, %v290
    %v292 = vpop.f32.mrf.mxu0
    %293 = vmatprep.mubr.f32.mxu0 0.0
    %294 = vmatmul.mubr.f32.gmra.mxu0 %v123
    %v295 = vpop.f32.mrf.mxu0
    %v296 = vadd.f32 0.0, %v295
    %v297 = vpop.f32.mrf.mxu0
    %298 = vmatprep.mubr.f32.mxu0 0.0
    %299 = vmatmul.mubr.f32.gmra.mxu0 %v126
    %v300 = vpop.f32.mrf.mxu0
    %v301 = vadd.f32 0.0, %v300
    %v302 = vpop.f32.mrf.mxu0
    %303 = vmatprep.mubr.f32.mxu0 0.0
    %304 = vmatmul.mubr.f32.gmra.mxu0 %v129
    %v305 = vpop.f32.mrf.mxu0
    %v306 = vadd.f32 0.0, %v305
    %v307 = vpop.f32.mrf.mxu0
    %308 = vmatprep.mubr.f32.mxu0 0.0
    %309 = vmatmul.mubr.f32.gmra.mxu0 %v132
    %v310 = vpop.f32.mrf.mxu0
    %v311 = vadd.f32 0.0, %v310
    %v312 = vpop.f32.mrf.mxu0
    %313 = vdwg.mxu0
    %v314 = vld [vmem:[%s1] sm:$0xff]
    %v315 = vld [vmem:[%s1 + $0x8] sm:$0xff]
    %v316 = vld [vmem:[%s1 + $0x10] sm:$0xff]
    %v317 = vld [vmem:[%s1 + $0x18] sm:$0xff]
    %v318 = vld [vmem:[%s1 + $0x20] sm:$0xff]
    %v319 = vld [vmem:[%s1 + $0x28] sm:$0xff]
    %v320 = vld [vmem:[%s1 + $0x30] sm:$0xff]
    %v321 = vld [vmem:[%s1 + $0x38] sm:$0xff]
    %v322 = vld [vmem:[%s1 + $0x40] sm:$0xff]
    %v323 = vld [vmem:[%s1 + $0x48] sm:$0xff]
    %v324 = vld [vmem:[%s1 + $0x50] sm:$0xff]
    %v325 = vld [vmem:[%s1 + $0x58] sm:$0xff]
    %v326 = vld [vmem:[%s1 + $0x60] sm:$0xff]
    %v327 = vld [vmem:[%s1 + $0x68] sm:$0xff]
    %v328 = vld [vmem:[%s1 + $0x70] sm:$0xff]
    %v329 = vld [vmem:[%s1 + $0x78] sm:$0xff]
    %v330 = vld [vmem:[%s1 + $0x80] sm:$0xff]
    %v331 = vld [vmem:[%s1 + $0x88] sm:$0xff]
    %v332 = vld [vmem:[%s1 + $0x90] sm:$0xff]
    %v333 = vld [vmem:[%s1 + $0x98] sm:$0xff]
    %v334 = vld [vmem:[%s1 + $0xa0] sm:$0xff]
    %v335 = vld [vmem:[%s1 + $0xa8] sm:$0xff]
    %v336 = vld [vmem:[%s1 + $0xb0] sm:$0xf]
    %v337 = vld [vmem:[%s3] sm:$0xff]
    %vm338 = vcmask 64512
    %v340 = vsel %vm338, %v314, 0
    %v343 = vsel %vm338, %v315, 0
    %v346 = vsel %vm338, %v316, 0
    %v349 = vsel %vm338, %v317, 0
    %v352 = vsel %vm338, %v318, 0
    %v355 = vsel %vm338, %v319, 0
    %v358 = vsel %vm338, %v320, 0
    %v361 = vsel %vm338, %v321, 0
    %v364 = vsel %vm338, %v322, 0
    %v367 = vsel %vm338, %v323, 0
    %v370 = vsel %vm338, %v324, 0
    %v373 = vsel %vm338, %v325, 0
    %v376 = vsel %vm338, %v326, 0
    %v379 = vsel %vm338, %v327, 0
    %v382 = vsel %vm338, %v328, 0
    %v385 = vsel %vm338, %v329, 0
    %v388 = vsel %vm338, %v330, 0
    %v391 = vsel %vm338, %v331, 0
    %v394 = vsel %vm338, %v332, 0
    %v397 = vsel %vm338, %v333, 0
    %v400 = vsel %vm338, %v334, 0
    %v403 = vsel %vm338, %v335, 0
    %v406 = vsel %vm338, %v336, 0
    %408 = vmatprep.subr.mxu0 0.0
    %409 = vmatpush1.msra.mxu0 0.0
    %410 = vmatprep.subr.mxu0 0.0
    %411 = vmatpush1.msra.mxu0 0.0
    %412 = vmatprep.subr.mxu0 0.0
    %413 = vmatpush1.msra.mxu0 0.0
    %414 = vmatprep.subr.mxu0 0.0
    %415 = vmatpush1.msra.mxu0 0.0
    %416 = vmatprep.subr.mxu0 0.0
    %417 = vmatpush1.msra.mxu0 0.0
    %418 = vmatprep.subr.mxu0 0.0
    %419 = vmatpush1.msra.mxu0 0.0
    %420 = vmatprep.subr.mxu0 0.0
    %421 = vmatpush1.msra.mxu0 0.0
    %422 = vmatprep.subr.mxu0 0.0
    %423 = vmatpush1.msra.mxu0 0.0
    %424 = vmatprep.subr.mxu0 0.0
    %425 = vmatpush1.msra.mxu0 0.0
    %426 = vmatprep.subr.mxu0 0.0
    %427 = vmatpush1.msra.mxu0 0.0
    %428 = vmatprep.subr.mxu0 0.0
    %429 = vmatpush1.msra.mxu0 0.0
    %430 = vmatprep.subr.mxu0 0.0
    %431 = vmatpush1.msra.mxu0 0.0
    %432 = vmatprep.subr.mxu0 0.0
    %433 = vmatpush1.msra.mxu0 0.0
    %434 = vmatprep.subr.mxu0 0.0
    %435 = vmatpush1.msra.mxu0 0.0
    %436 = vmatprep.subr.mxu0 0.0
    %437 = vmatpush1.msra.mxu0 0.0
    %438 = vmatprep.subr.mxu0 0.0
    %439 = vmatpush1.msra.mxu0 %v337
    %440 = vmatprep.subr.mxu0 0.0
    %441 = vmatpush2.msra.mxu0 0.0
    %442 = vmatprep.subr.mxu0 0.0
    %443 = vmatpush2.msra.mxu0 0.0
    %444 = vmatprep.subr.mxu0 0.0
    %445 = vmatpush2.msra.mxu0 0.0
    %446 = vmatprep.subr.mxu0 0.0
    %447 = vmatpush2.msra.mxu0 0.0
    %448 = vmatprep.subr.mxu0 0.0
    %449 = vmatpush2.msra.mxu0 0.0
    %450 = vmatprep.subr.mxu0 0.0
    %451 = vmatpush2.msra.mxu0 0.0
    %452 = vmatprep.subr.mxu0 0.0
    %453 = vmatpush2.msra.mxu0 0.0
    %454 = vmatprep.subr.mxu0 0.0
    %455 = vmatpush2.msra.mxu0 0.0
    %456 = vmatprep.subr.mxu0 0.0
    %457 = vmatpush2.msra.mxu0 0.0
    %458 = vmatprep.subr.mxu0 0.0
    %459 = vmatpush2.msra.mxu0 0.0
    %460 = vmatprep.subr.mxu0 0.0
    %461 = vmatpush2.msra.mxu0 0.0
    %462 = vmatprep.subr.mxu0 0.0
    %463 = vmatpush2.msra.mxu0 0.0
    %464 = vmatprep.subr.mxu0 0.0
    %465 = vmatpush2.msra.mxu0 0.0
    %466 = vmatprep.subr.mxu0 0.0
    %467 = vmatpush2.msra.mxu0 0.0
    %468 = vmatprep.subr.mxu0 0.0
    %469 = vmatpush2.msra.mxu0 0.0
    %470 = vmatprep.subr.mxu0 0.0
    %471 = vmatpush2.msra.mxu0 0.0
    %472 = vmatprep.mubr.f32.mxu0 0.0
    %473 = vmatmul.mubr.f32.gmra.mxu0 %v340
    %v474 = vpop.f32.mrf.mxu0
    %v475 = vadd.f32 0.0, %v474
    %v476 = vpop.f32.mrf.mxu0
    %477 = vmatprep.mubr.f32.mxu0 0.0
    %478 = vmatmul.mubr.f32.gmra.mxu0 %v343
    %v479 = vpop.f32.mrf.mxu0
    %v480 = vadd.f32 0.0, %v479
    %v481 = vpop.f32.mrf.mxu0
    %482 = vmatprep.mubr.f32.mxu0 0.0
    %483 = vmatmul.mubr.f32.gmra.mxu0 %v346
    %v484 = vpop.f32.mrf.mxu0
    %v485 = vadd.f32 0.0, %v484
    %v486 = vpop.f32.mrf.mxu0
    %487 = vmatprep.mubr.f32.mxu0 0.0
    %488 = vmatmul.mubr.f32.gmra.mxu0 %v349
    %v489 = vpop.f32.mrf.mxu0
    %v490 = vadd.f32 0.0, %v489
    %v491 = vpop.f32.mrf.mxu0
    %492 = vmatprep.mubr.f32.mxu0 0.0
    %493 = vmatmul.mubr.f32.gmra.mxu0 %v352
    %v494 = vpop.f32.mrf.mxu0
    %v495 = vadd.f32 0.0, %v494
    %v496 = vpop.f32.mrf.mxu0
    %497 = vmatprep.mubr.f32.mxu0 0.0
    %498 = vmatmul.mubr.f32.gmra.mxu0 %v355
    %v499 = vpop.f32.mrf.mxu0
    %v500 = vadd.f32 0.0, %v499
    %v501 = vpop.f32.mrf.mxu0
    %502 = vmatprep.mubr.f32.mxu0 0.0
    %503 = vmatmul.mubr.f32.gmra.mxu0 %v358
    %v504 = vpop.f32.mrf.mxu0
    %v505 = vadd.f32 0.0, %v504
    %v506 = vpop.f32.mrf.mxu0
    %507 = vmatprep.mubr.f32.mxu0 0.0
    %508 = vmatmul.mubr.f32.gmra.mxu0 %v361
    %v509 = vpop.f32.mrf.mxu0
    %v510 = vadd.f32 0.0, %v509
    %v511 = vpop.f32.mrf.mxu0
    %512 = vmatprep.mubr.f32.mxu0 0.0
    %513 = vmatmul.mubr.f32.gmra.mxu0 %v364
    %v514 = vpop.f32.mrf.mxu0
    %v515 = vadd.f32 0.0, %v514
    %v516 = vpop.f32.mrf.mxu0
    %517 = vmatprep.mubr.f32.mxu0 0.0
    %518 = vmatmul.mubr.f32.gmra.mxu0 %v367
    %v519 = vpop.f32.mrf.mxu0
    %v520 = vadd.f32 0.0, %v519
    %v521 = vpop.f32.mrf.mxu0
    %522 = vmatprep.mubr.f32.mxu0 0.0
    %523 = vmatmul.mubr.f32.gmra.mxu0 %v370
    %v524 = vpop.f32.mrf.mxu0
    %v525 = vadd.f32 0.0, %v524
    %v526 = vpop.f32.mrf.mxu0
    %527 = vmatprep.mubr.f32.mxu0 0.0
    %528 = vmatmul.mubr.f32.gmra.mxu0 %v373
    %v529 = vpop.f32.mrf.mxu0
    %v530 = vadd.f32 0.0, %v529
    %v531 = vpop.f32.mrf.mxu0
    %532 = vmatprep.mubr.f32.mxu0 0.0
    %533 = vmatmul.mubr.f32.gmra.mxu0 %v376
    %v534 = vpop.f32.mrf.mxu0
    %v535 = vadd.f32 0.0, %v534
    %v536 = vpop.f32.mrf.mxu0
    %537 = vmatprep.mubr.f32.mxu0 0.0
    %538 = vmatmul.mubr.f32.gmra.mxu0 %v379
    %v539 = vpop.f32.mrf.mxu0
    %v540 = vadd.f32 0.0, %v539
    %v541 = vpop.f32.mrf.mxu0
    %542 = vmatprep.mubr.f32.mxu0 0.0
    %543 = vmatmul.mubr.f32.gmra.mxu0 %v382
    %v544 = vpop.f32.mrf.mxu0
    %v545 = vadd.f32 0.0, %v544
    %v546 = vpop.f32.mrf.mxu0
    %547 = vmatprep.mubr.f32.mxu0 0.0
    %548 = vmatmul.mubr.f32.gmra.mxu0 %v385
    %v549 = vpop.f32.mrf.mxu0
    %v550 = vadd.f32 0.0, %v549
    %v551 = vpop.f32.mrf.mxu0
    %552 = vmatprep.mubr.f32.mxu0 0.0
    %553 = vmatmul.mubr.f32.gmra.mxu0 %v388
    %v554 = vpop.f32.mrf.mxu0
    %v555 = vadd.f32 0.0, %v554
    %v556 = vpop.f32.mrf.mxu0
    %557 = vmatprep.mubr.f32.mxu0 0.0
    %558 = vmatmul.mubr.f32.gmra.mxu0 %v391
    %v559 = vpop.f32.mrf.mxu0
    %v560 = vadd.f32 0.0, %v559
    %v561 = vpop.f32.mrf.mxu0
    %562 = vmatprep.mubr.f32.mxu0 0.0
    %563 = vmatmul.mubr.f32.gmra.mxu0 %v394
    %v564 = vpop.f32.mrf.mxu0
    %v565 = vadd.f32 0.0, %v564
    %v566 = vpop.f32.mrf.mxu0
    %567 = vmatprep.mubr.f32.mxu0 0.0
    %568 = vmatmul.mubr.f32.gmra.mxu0 %v397
    %v569 = vpop.f32.mrf.mxu0
    %v570 = vadd.f32 0.0, %v569
    %v571 = vpop.f32.mrf.mxu0
    %572 = vmatprep.mubr.f32.mxu0 0.0
    %573 = vmatmul.mubr.f32.gmra.mxu0 %v400
    %v574 = vpop.f32.mrf.mxu0
    %v575 = vadd.f32 0.0, %v574
    %v576 = vpop.f32.mrf.mxu0
    %577 = vmatprep.mubr.f32.mxu0 0.0
    %578 = vmatmul.mubr.f32.gmra.mxu0 %v403
    %v579 = vpop.f32.mrf.mxu0
    %v580 = vadd.f32 0.0, %v579
    %v581 = vpop.f32.mrf.mxu0
    %582 = vmatprep.mubr.f32.mxu0 0.0
    %583 = vmatmul.mubr.f32.gmra.mxu0 %v406
    %v584 = vpop.f32.mrf.mxu0
    %v585 = vadd.f32 0.0, %v584
    %v586 = vpop.f32.mrf.mxu0
    %587 = vdwg.mxu0
    %v588 = vld [vmem:[%s4] sm:$0xff]
    %v589 = vld [vmem:[%s4 + $0x8] sm:$0xff]
    %v590 = vld [vmem:[%s4 + $0x10] sm:$0xff]
    %v591 = vld [vmem:[%s4 + $0x18] sm:$0xff]
    %v592 = vld [vmem:[%s4 + $0x20] sm:$0xff]
    %v593 = vld [vmem:[%s4 + $0x28] sm:$0xff]
    %v594 = vld [vmem:[%s4 + $0x30] sm:$0xff]
    %v595 = vld [vmem:[%s4 + $0x38] sm:$0xff]
    %v596 = vld [vmem:[%s4 + $0x40] sm:$0xff]
    %v597 = vld [vmem:[%s4 + $0x48] sm:$0xff]
    %v598 = vld [vmem:[%s4 + $0x50] sm:$0xff]
    %v599 = vld [vmem:[%s4 + $0x58] sm:$0xff]
    %v600 = vld [vmem:[%s4 + $0x60] sm:$0xff]
    %v601 = vld [vmem:[%s4 + $0x68] sm:$0xff]
    %v602 = vld [vmem:[%s4 + $0x70] sm:$0xff]
    %v603 = vld [vmem:[%s4 + $0x78] sm:$0xff]
    %v604 = vld [vmem:[#allocation2] sm:$0xff]
    %v605 = vld [vmem:[#allocation2 + $0x8] sm:$0xff]
    %v606 = vld [vmem:[#allocation2 + $0x10] sm:$0xff]
    %v607 = vld [vmem:[#allocation2 + $0x18] sm:$0xff]
    %v608 = vld [vmem:[#allocation2 + $0x20] sm:$0xff]
    %v609 = vld [vmem:[#allocation2 + $0x28] sm:$0xff]
    %v610 = vld [vmem:[#allocation2 + $0x30] sm:$0xff]
    %v611 = vld [vmem:[#allocation2 + $0x38] sm:$0xff]
    %v613 = vsel %vm64, %v475, 0
    %v616 = vsel %vm64, %v480, 0
    %v619 = vsel %vm64, %v485, 0
    %v622 = vsel %vm64, %v490, 0
    %v625 = vsel %vm64, %v495, 0
    %v628 = vsel %vm64, %v500, 0
    %v631 = vsel %vm64, %v505, 0
    %v634 = vsel %vm64, %v510, 0
    %v637 = vsel %vm64, %v515, 0
    %v640 = vsel %vm64, %v520, 0
    %v643 = vsel %vm64, %v525, 0
    %v646 = vsel %vm64, %v530, 0
    %v649 = vsel %vm64, %v535, 0
    %v652 = vsel %vm64, %v540, 0
    %v655 = vsel %vm64, %v545, 0
    %v658 = vsel %vm64, %v550, 0
    %v661 = vsel %vm64, %v555, 0
    %v664 = vsel %vm64, %v560, 0
    %v667 = vsel %vm64, %v565, 0
    %v670 = vsel %vm64, %v570, 0
    %v673 = vsel %vm64, %v575, 0
    %v676 = vsel %vm64, %v580, 0
    %v679 = vsel %vm64, %v585, 0
    %681 = vmatprep.subr.mxu0 0.0
    %682 = vmatpush1.msra.mxu0 0.0
    %683 = vmatprep.subr.mxu0 0.0
    %684 = vmatpush1.msra.mxu0 0.0
    %685 = vmatprep.subr.mxu0 0.0
    %686 = vmatpush1.msra.mxu0 0.0
    %687 = vmatprep.subr.mxu0 0.0
    %688 = vmatpush1.msra.mxu0 0.0
    %689 = vmatprep.subr.mxu0 0.0
    %690 = vmatpush1.msra.mxu0 0.0
    %691 = vmatprep.subr.mxu0 0.0
    %692 = vmatpush1.msra.mxu0 0.0
    %693 = vmatprep.subr.mxu0 0.0
    %694 = vmatpush1.msra.mxu0 0.0
    %695 = vmatprep.subr.mxu0 0.0
    %696 = vmatpush1.msra.mxu0 0.0
    %697 = vmatprep.subr.mxu0 0.0
    %698 = vmatpush1.msra.mxu0 0.0
    %699 = vmatprep.subr.mxu0 0.0
    %700 = vmatpush1.msra.mxu0 0.0
    %701 = vmatprep.subr.mxu0 0.0
    %702 = vmatpush1.msra.mxu0 0.0
    %703 = vmatprep.subr.mxu0 0.0
    %704 = vmatpush1.msra.mxu0 0.0
    %705 = vmatprep.subr.mxu0 %v611
    %706 = vmatpush1.msra.mxu0 %v610
    %707 = vmatprep.subr.mxu0 %v609
    %708 = vmatpush1.msra.mxu0 %v608
    %709 = vmatprep.subr.mxu0 %v607
    %710 = vmatpush1.msra.mxu0 %v606
    %711 = vmatprep.subr.mxu0 %v605
    %712 = vmatpush1.msra.mxu0 %v604
    %713 = vmatprep.subr.mxu0 0.0
    %714 = vmatpush2.msra.mxu0 0.0
    %715 = vmatprep.subr.mxu0 0.0
    %716 = vmatpush2.msra.mxu0 0.0
    %717 = vmatprep.subr.mxu0 0.0
    %718 = vmatpush2.msra.mxu0 0.0
    %719 = vmatprep.subr.mxu0 0.0
    %720 = vmatpush2.msra.mxu0 0.0
    %721 = vmatprep.subr.mxu0 0.0
    %722 = vmatpush2.msra.mxu0 0.0
    %723 = vmatprep.subr.mxu0 0.0
    %724 = vmatpush2.msra.mxu0 0.0
    %725 = vmatprep.subr.mxu0 0.0
    %726 = vmatpush2.msra.mxu0 0.0
    %727 = vmatprep.subr.mxu0 0.0
    %728 = vmatpush2.msra.mxu0 0.0
    %729 = vmatprep.subr.mxu0 0.0
    %730 = vmatpush2.msra.mxu0 0.0
    %731 = vmatprep.subr.mxu0 0.0
    %732 = vmatpush2.msra.mxu0 0.0
    %733 = vmatprep.subr.mxu0 0.0
    %734 = vmatpush2.msra.mxu0 0.0
    %735 = vmatprep.subr.mxu0 0.0
    %736 = vmatpush2.msra.mxu0 0.0
    %737 = vmatprep.subr.mxu0 0.0
    %738 = vmatpush2.msra.mxu0 0.0
    %739 = vmatprep.subr.mxu0 0.0
    %740 = vmatpush2.msra.mxu0 0.0
    %741 = vmatprep.subr.mxu0 0.0
    %742 = vmatpush2.msra.mxu0 0.0
    %743 = vmatprep.subr.mxu0 0.0
    %744 = vmatpush2.msra.mxu0 0.0
    %745 = vmatprep.mubr.f32.mxu0 0.0
    %746 = vmatmul.mubr.f32.gmra.mxu0 %v613
    %v747 = vpop.f32.mrf.mxu0
    %v748 = vadd.f32 0.0, %v747
    %v749 = vpop.f32.mrf.mxu0
    %v750 = vadd.f32 0.0, %v749
    %751 = vmatprep.mubr.f32.mxu0 0.0
    %752 = vmatmul.mubr.f32.gmra.mxu0 %v616
    %v753 = vpop.f32.mrf.mxu0
    %v754 = vadd.f32 0.0, %v753
    %v755 = vpop.f32.mrf.mxu0
    %v756 = vadd.f32 0.0, %v755
    %757 = vmatprep.mubr.f32.mxu0 0.0
    %758 = vmatmul.mubr.f32.gmra.mxu0 %v619
    %v759 = vpop.f32.mrf.mxu0
    %v760 = vadd.f32 0.0, %v759
    %v761 = vpop.f32.mrf.mxu0
    %v762 = vadd.f32 0.0, %v761
    %763 = vmatprep.mubr.f32.mxu0 0.0
    %764 = vmatmul.mubr.f32.gmra.mxu0 %v622
    %v765 = vpop.f32.mrf.mxu0
    %v766 = vadd.f32 0.0, %v765
    %v767 = vpop.f32.mrf.mxu0
    %v768 = vadd.f32 0.0, %v767
    %769 = vmatprep.mubr.f32.mxu0 0.0
    %770 = vmatmul.mubr.f32.gmra.mxu0 %v625
    %v771 = vpop.f32.mrf.mxu0
    %v772 = vadd.f32 0.0, %v771
    %v773 = vpop.f32.mrf.mxu0
    %v774 = vadd.f32 0.0, %v773
    %775 = vmatprep.mubr.f32.mxu0 0.0
    %776 = vmatmul.mubr.f32.gmra.mxu0 %v628
    %v777 = vpop.f32.mrf.mxu0
    %v778 = vadd.f32 0.0, %v777
    %v779 = vpop.f32.mrf.mxu0
    %v780 = vadd.f32 0.0, %v779
    %781 = vmatprep.mubr.f32.mxu0 0.0
    %782 = vmatmul.mubr.f32.gmra.mxu0 %v631
    %v783 = vpop.f32.mrf.mxu0
    %v784 = vadd.f32 0.0, %v783
    %v785 = vpop.f32.mrf.mxu0
    %v786 = vadd.f32 0.0, %v785
    %787 = vmatprep.mubr.f32.mxu0 0.0
    %788 = vmatmul.mubr.f32.gmra.mxu0 %v634
    %v789 = vpop.f32.mrf.mxu0
    %v790 = vadd.f32 0.0, %v789
    %v791 = vpop.f32.mrf.mxu0
    %v792 = vadd.f32 0.0, %v791
    %793 = vmatprep.mubr.f32.mxu0 0.0
    %794 = vmatmul.mubr.f32.gmra.mxu0 %v637
    %v795 = vpop.f32.mrf.mxu0
    %v796 = vadd.f32 0.0, %v795
    %v797 = vpop.f32.mrf.mxu0
    %v798 = vadd.f32 0.0, %v797
    %799 = vmatprep.mubr.f32.mxu0 0.0
    %800 = vmatmul.mubr.f32.gmra.mxu0 %v640
    %v801 = vpop.f32.mrf.mxu0
    %v802 = vadd.f32 0.0, %v801
    %v803 = vpop.f32.mrf.mxu0
    %v804 = vadd.f32 0.0, %v803
    %805 = vmatprep.mubr.f32.mxu0 0.0
    %806 = vmatmul.mubr.f32.gmra.mxu0 %v643
    %v807 = vpop.f32.mrf.mxu0
    %v808 = vadd.f32 0.0, %v807
    %v809 = vpop.f32.mrf.mxu0
    %v810 = vadd.f32 0.0, %v809
    %811 = vmatprep.mubr.f32.mxu0 0.0
    %812 = vmatmul.mubr.f32.gmra.mxu0 %v646
    %v813 = vpop.f32.mrf.mxu0
    %v814 = vadd.f32 0.0, %v813
    %v815 = vpop.f32.mrf.mxu0
    %v816 = vadd.f32 0.0, %v815
    %817 = vmatprep.mubr.f32.mxu0 0.0
    %818 = vmatmul.mubr.f32.gmra.mxu0 %v649
    %v819 = vpop.f32.mrf.mxu0
    %v820 = vadd.f32 0.0, %v819
    %v821 = vpop.f32.mrf.mxu0
    %v822 = vadd.f32 0.0, %v821
    %823 = vmatprep.mubr.f32.mxu0 0.0
    %824 = vmatmul.mubr.f32.gmra.mxu0 %v652
    %v825 = vpop.f32.mrf.mxu0
    %v826 = vadd.f32 0.0, %v825
    %v827 = vpop.f32.mrf.mxu0
    %v828 = vadd.f32 0.0, %v827
    %829 = vmatprep.mubr.f32.mxu0 0.0
    %830 = vmatmul.mubr.f32.gmra.mxu0 %v655
    %v831 = vpop.f32.mrf.mxu0
    %v832 = vadd.f32 0.0, %v831
    %v833 = vpop.f32.mrf.mxu0
    %v834 = vadd.f32 0.0, %v833
    %835 = vmatprep.mubr.f32.mxu0 0.0
    %836 = vmatmul.mubr.f32.gmra.mxu0 %v658
    %v837 = vpop.f32.mrf.mxu0
    %v838 = vadd.f32 0.0, %v837
    %v839 = vpop.f32.mrf.mxu0
    %v840 = vadd.f32 0.0, %v839
    %841 = vmatprep.mubr.f32.mxu0 0.0
    %842 = vmatmul.mubr.f32.gmra.mxu0 %v661
    %v843 = vpop.f32.mrf.mxu0
    %v844 = vadd.f32 0.0, %v843
    %v845 = vpop.f32.mrf.mxu0
    %v846 = vadd.f32 0.0, %v845
    %847 = vmatprep.mubr.f32.mxu0 0.0
    %848 = vmatmul.mubr.f32.gmra.mxu0 %v664
    %v849 = vpop.f32.mrf.mxu0
    %v850 = vadd.f32 0.0, %v849
    %v851 = vpop.f32.mrf.mxu0
    %v852 = vadd.f32 0.0, %v851
    %853 = vmatprep.mubr.f32.mxu0 0.0
    %854 = vmatmul.mubr.f32.gmra.mxu0 %v667
    %v855 = vpop.f32.mrf.mxu0
    %v856 = vadd.f32 0.0, %v855
    %v857 = vpop.f32.mrf.mxu0
    %v858 = vadd.f32 0.0, %v857
    %859 = vmatprep.mubr.f32.mxu0 0.0
    %860 = vmatmul.mubr.f32.gmra.mxu0 %v670
    %v861 = vpop.f32.mrf.mxu0
    %v862 = vadd.f32 0.0, %v861
    %v863 = vpop.f32.mrf.mxu0
    %v864 = vadd.f32 0.0, %v863
    %865 = vmatprep.mubr.f32.mxu0 0.0
    %866 = vmatmul.mubr.f32.gmra.mxu0 %v673
    %v867 = vpop.f32.mrf.mxu0
    %v868 = vadd.f32 0.0, %v867
    %v869 = vpop.f32.mrf.mxu0
    %v870 = vadd.f32 0.0, %v869
    %871 = vmatprep.mubr.f32.mxu0 0.0
    %872 = vmatmul.mubr.f32.gmra.mxu0 %v676
    %v873 = vpop.f32.mrf.mxu0
    %v874 = vadd.f32 0.0, %v873
    %v875 = vpop.f32.mrf.mxu0
    %v876 = vadd.f32 0.0, %v875
    %877 = vmatprep.mubr.f32.mxu0 0.0
    %878 = vmatmul.mubr.f32.gmra.mxu0 %v679
    %v879 = vpop.f32.mrf.mxu0
    %v880 = vadd.f32 0.0, %v879
    %v881 = vpop.f32.mrf.mxu0
    %v882 = vadd.f32 0.0, %v881
    %883 = vdwg.mxu0
    %vm884 = vcmask 523264
    %v886 = vsel %vm884, %v201, 0
    %v889 = vsel %vm884, %v206, 0
    %v892 = vsel %vm884, %v211, 0
    %v895 = vsel %vm884, %v216, 0
    %v898 = vsel %vm884, %v221, 0
    %v901 = vsel %vm884, %v226, 0
    %v904 = vsel %vm884, %v231, 0
    %v907 = vsel %vm884, %v236, 0
    %v910 = vsel %vm884, %v241, 0
    %v913 = vsel %vm884, %v246, 0
    %v916 = vsel %vm884, %v251, 0
    %v919 = vsel %vm884, %v256, 0
    %v922 = vsel %vm884, %v261, 0
    %v925 = vsel %vm884, %v266, 0
    %v928 = vsel %vm884, %v271, 0
    %v931 = vsel %vm884, %v276, 0
    %v934 = vsel %vm884, %v281, 0
    %v937 = vsel %vm884, %v286, 0
    %v940 = vsel %vm884, %v291, 0
    %v943 = vsel %vm884, %v296, 0
    %v946 = vsel %vm884, %v301, 0
    %v949 = vsel %vm884, %v306, 0
    %v952 = vsel %vm884, %v311, 0
    %954 = vmatprep.subr.mxu0 0.0
    %955 = vmatpush1.msra.mxu0 0.0
    %956 = vmatprep.subr.mxu0 0.0
    %957 = vmatpush1.msra.mxu0 0.0
    %958 = vmatprep.subr.mxu0 0.0
    %959 = vmatpush1.msra.mxu0 0.0
    %960 = vmatprep.subr.mxu0 0.0
    %961 = vmatpush1.msra.mxu0 0.0
    %962 = vmatprep.subr.mxu0 0.0
    %963 = vmatpush1.msra.mxu0 0.0
    %964 = vmatprep.subr.mxu0 0.0
    %965 = vmatpush1.msra.mxu0 0.0
    %966 = vmatprep.subr.mxu0 0.0
    %967 = vmatpush1.msra.mxu0 0.0
    %968 = vmatprep.subr.mxu0 0.0
    %969 = vmatpush1.msra.mxu0 0.0
    %970 = vmatprep.subr.mxu0 %v603
    %971 = vmatpush1.msra.mxu0 %v602
    %972 = vmatprep.subr.mxu0 %v601
    %973 = vmatpush1.msra.mxu0 %v600
    %974 = vmatprep.subr.mxu0 %v599
    %975 = vmatpush1.msra.mxu0 %v598
    %976 = vmatprep.subr.mxu0 %v597
    %977 = vmatpush1.msra.mxu0 %v596
    %978 = vmatprep.subr.mxu0 %v595
    %979 = vmatpush1.msra.mxu0 %v594
    %980 = vmatprep.subr.mxu0 %v593
    %981 = vmatpush1.msra.mxu0 %v592
    %982 = vmatprep.subr.mxu0 %v591
    %983 = vmatpush1.msra.mxu0 %v590
    %984 = vmatprep.subr.mxu0 %v589
    %985 = vmatpush1.msra.mxu0 %v588
    %986 = vmatprep.subr.mxu0 0.0
    %987 = vmatpush2.msra.mxu0 0.0
    %988 = vmatprep.subr.mxu0 0.0
    %989 = vmatpush2.msra.mxu0 0.0
    %990 = vmatprep.subr.mxu0 0.0
    %991 = vmatpush2.msra.mxu0 0.0
    %992 = vmatprep.subr.mxu0 0.0
    %993 = vmatpush2.msra.mxu0 0.0
    %994 = vmatprep.subr.mxu0 0.0
    %995 = vmatpush2.msra.mxu0 0.0
    %996 = vmatprep.subr.mxu0 0.0
    %997 = vmatpush2.msra.mxu0 0.0
    %998 = vmatprep.subr.mxu0 0.0
    %999 = vmatpush2.msra.mxu0 0.0
    %1000 = vmatprep.subr.mxu0 0.0
    %1001 = vmatpush2.msra.mxu0 0.0
    %1002 = vmatprep.subr.mxu0 0.0
    %1003 = vmatpush2.msra.mxu0 0.0
    %1004 = vmatprep.subr.mxu0 0.0
    %1005 = vmatpush2.msra.mxu0 0.0
    %1006 = vmatprep.subr.mxu0 0.0
    %1007 = vmatpush2.msra.mxu0 0.0
    %1008 = vmatprep.subr.mxu0 0.0
    %1009 = vmatpush2.msra.mxu0 0.0
    %1010 = vmatprep.subr.mxu0 0.0
    %1011 = vmatpush2.msra.mxu0 0.0
    %1012 = vmatprep.subr.mxu0 0.0
    %1013 = vmatpush2.msra.mxu0 0.0
    %1014 = vmatprep.subr.mxu0 0.0
    %1015 = vmatpush2.msra.mxu0 0.0
    %1016 = vmatprep.subr.mxu0 0.0
    %1017 = vmatpush2.msra.mxu0 0.0
    %1018 = vmatprep.mubr.f32.mxu0 0.0
    %1019 = vmatmul.mubr.f32.gmra.mxu0 %v886
    %v1020 = vpop.f32.mrf.mxu0
    %v1021 = vadd.f32 %v748, %v1020
    %v1022 = vpop.f32.mrf.mxu0
    %v1023 = vadd.f32 %v750, %v1022
    %1024 = vmatprep.mubr.f32.mxu0 0.0
    %1025 = vmatmul.mubr.f32.gmra.mxu0 %v889
    %v1026 = vpop.f32.mrf.mxu0
    %v1027 = vadd.f32 %v754, %v1026
    %v1028 = vpop.f32.mrf.mxu0
    %v1029 = vadd.f32 %v756, %v1028
    %1030 = vmatprep.mubr.f32.mxu0 0.0
    %1031 = vmatmul.mubr.f32.gmra.mxu0 %v892
    %v1032 = vpop.f32.mrf.mxu0
    %v1033 = vadd.f32 %v760, %v1032
    %v1034 = vpop.f32.mrf.mxu0
    %v1035 = vadd.f32 %v762, %v1034
    %1036 = vmatprep.mubr.f32.mxu0 0.0
    %1037 = vmatmul.mubr.f32.gmra.mxu0 %v895
    %v1038 = vpop.f32.mrf.mxu0
    %v1039 = vadd.f32 %v766, %v1038
    %v1040 = vpop.f32.mrf.mxu0
    %v1041 = vadd.f32 %v768, %v1040
    %1042 = vmatprep.mubr.f32.mxu0 0.0
    %1043 = vmatmul.mubr.f32.gmra.mxu0 %v898
    %v1044 = vpop.f32.mrf.mxu0
    %v1045 = vadd.f32 %v772, %v1044
    %v1046 = vpop.f32.mrf.mxu0
    %v1047 = vadd.f32 %v774, %v1046
    %1048 = vmatprep.mubr.f32.mxu0 0.0
    %1049 = vmatmul.mubr.f32.gmra.mxu0 %v901
    %v1050 = vpop.f32.mrf.mxu0
    %v1051 = vadd.f32 %v778, %v1050
    %v1052 = vpop.f32.mrf.mxu0
    %v1053 = vadd.f32 %v780, %v1052
    %1054 = vmatprep.mubr.f32.mxu0 0.0
    %1055 = vmatmul.mubr.f32.gmra.mxu0 %v904
    %v1056 = vpop.f32.mrf.mxu0
    %v1057 = vadd.f32 %v784, %v1056
    %v1058 = vpop.f32.mrf.mxu0
    %v1059 = vadd.f32 %v786, %v1058
    %1060 = vmatprep.mubr.f32.mxu0 0.0
    %1061 = vmatmul.mubr.f32.gmra.mxu0 %v907
    %v1062 = vpop.f32.mrf.mxu0
    %v1063 = vadd.f32 %v790, %v1062
    %v1064 = vpop.f32.mrf.mxu0
    %v1065 = vadd.f32 %v792, %v1064
    %1066 = vmatprep.mubr.f32.mxu0 0.0
    %1067 = vmatmul.mubr.f32.gmra.mxu0 %v910
    %v1068 = vpop.f32.mrf.mxu0
    %v1069 = vadd.f32 %v796, %v1068
    %v1070 = vpop.f32.mrf.mxu0
    %v1071 = vadd.f32 %v798, %v1070
    %1072 = vmatprep.mubr.f32.mxu0 0.0
    %1073 = vmatmul.mubr.f32.gmra.mxu0 %v913
    %v1074 = vpop.f32.mrf.mxu0
    %v1075 = vadd.f32 %v802, %v1074
    %v1076 = vpop.f32.mrf.mxu0
    %v1077 = vadd.f32 %v804, %v1076
    %1078 = vmatprep.mubr.f32.mxu0 0.0
    %1079 = vmatmul.mubr.f32.gmra.mxu0 %v916
    %v1080 = vpop.f32.mrf.mxu0
    %v1081 = vadd.f32 %v808, %v1080
    %v1082 = vpop.f32.mrf.mxu0
    %v1083 = vadd.f32 %v810, %v1082
    %1084 = vmatprep.mubr.f32.mxu0 0.0
    %1085 = vmatmul.mubr.f32.gmra.mxu0 %v919
    %v1086 = vpop.f32.mrf.mxu0
    %v1087 = vadd.f32 %v814, %v1086
    %v1088 = vpop.f32.mrf.mxu0
    %v1089 = vadd.f32 %v816, %v1088
    %1090 = vmatprep.mubr.f32.mxu0 0.0
    %1091 = vmatmul.mubr.f32.gmra.mxu0 %v922
    %v1092 = vpop.f32.mrf.mxu0
    %v1093 = vadd.f32 %v820, %v1092
    %v1094 = vpop.f32.mrf.mxu0
    %v1095 = vadd.f32 %v822, %v1094
    %1096 = vmatprep.mubr.f32.mxu0 0.0
    %1097 = vmatmul.mubr.f32.gmra.mxu0 %v925
    %v1098 = vpop.f32.mrf.mxu0
    %v1099 = vadd.f32 %v826, %v1098
    %v1100 = vpop.f32.mrf.mxu0
    %v1101 = vadd.f32 %v828, %v1100
    %1102 = vmatprep.mubr.f32.mxu0 0.0
    %1103 = vmatmul.mubr.f32.gmra.mxu0 %v928
    %v1104 = vpop.f32.mrf.mxu0
    %v1105 = vadd.f32 %v832, %v1104
    %v1106 = vpop.f32.mrf.mxu0
    %v1107 = vadd.f32 %v834, %v1106
    %1108 = vmatprep.mubr.f32.mxu0 0.0
    %1109 = vmatmul.mubr.f32.gmra.mxu0 %v931
    %v1110 = vpop.f32.mrf.mxu0
    %v1111 = vadd.f32 %v838, %v1110
    %v1112 = vpop.f32.mrf.mxu0
    %v1113 = vadd.f32 %v840, %v1112
    %1114 = vmatprep.mubr.f32.mxu0 0.0
    %1115 = vmatmul.mubr.f32.gmra.mxu0 %v934
    %v1116 = vpop.f32.mrf.mxu0
    %v1117 = vadd.f32 %v844, %v1116
    %v1118 = vpop.f32.mrf.mxu0
    %v1119 = vadd.f32 %v846, %v1118
    %1120 = vmatprep.mubr.f32.mxu0 0.0
    %1121 = vmatmul.mubr.f32.gmra.mxu0 %v937
    %v1122 = vpop.f32.mrf.mxu0
    %v1123 = vadd.f32 %v850, %v1122
    %v1124 = vpop.f32.mrf.mxu0
    %v1125 = vadd.f32 %v852, %v1124
    %1126 = vmatprep.mubr.f32.mxu0 0.0
    %1127 = vmatmul.mubr.f32.gmra.mxu0 %v940
    %v1128 = vpop.f32.mrf.mxu0
    %v1129 = vadd.f32 %v856, %v1128
    %v1130 = vpop.f32.mrf.mxu0
    %v1131 = vadd.f32 %v858, %v1130
    %1132 = vmatprep.mubr.f32.mxu0 0.0
    %1133 = vmatmul.mubr.f32.gmra.mxu0 %v943
    %v1134 = vpop.f32.mrf.mxu0
    %v1135 = vadd.f32 %v862, %v1134
    %v1136 = vpop.f32.mrf.mxu0
    %v1137 = vadd.f32 %v864, %v1136
    %1138 = vmatprep.mubr.f32.mxu0 0.0
    %1139 = vmatmul.mubr.f32.gmra.mxu0 %v946
    %v1140 = vpop.f32.mrf.mxu0
    %v1141 = vadd.f32 %v868, %v1140
    %v1142 = vpop.f32.mrf.mxu0
    %v1143 = vadd.f32 %v870, %v1142
    %1144 = vmatprep.mubr.f32.mxu0 0.0
    %1145 = vmatmul.mubr.f32.gmra.mxu0 %v949
    %v1146 = vpop.f32.mrf.mxu0
    %v1147 = vadd.f32 %v874, %v1146
    %v1148 = vpop.f32.mrf.mxu0
    %v1149 = vadd.f32 %v876, %v1148
    %1150 = vmatprep.mubr.f32.mxu0 0.0
    %1151 = vmatmul.mubr.f32.gmra.mxu0 %v952
    %v1152 = vpop.f32.mrf.mxu0
    %v1153 = vadd.f32 %v880, %v1152
    %v1154 = vpop.f32.mrf.mxu0
    %v1155 = vadd.f32 %v882, %v1154
    %1156 = vdwg.mxu0
    %1157 = vst [vmem:[%s6] sm:$0xff] %v1021
    %1158 = vst.msk [vmem:[%s6 + $0x8] sm:$0xff] %vm64, %v1023
    %1159 = vst [vmem:[%s6 + $0x10] sm:$0xff] %v1027
    %1160 = vst.msk [vmem:[%s6 + $0x18] sm:$0xff] %vm64, %v1029
    %1161 = vst [vmem:[%s6 + $0x20] sm:$0xff] %v1033
    %1162 = vst.msk [vmem:[%s6 + $0x28] sm:$0xff] %vm64, %v1035
    %1163 = vst [vmem:[%s6 + $0x30] sm:$0xff] %v1039
    %1164 = vst.msk [vmem:[%s6 + $0x38] sm:$0xff] %vm64, %v1041
    %1165 = vst [vmem:[%s6 + $0x40] sm:$0xff] %v1045
    %1166 = vst.msk [vmem:[%s6 + $0x48] sm:$0xff] %vm64, %v1047
    %1167 = vst [vmem:[%s6 + $0x50] sm:$0xff] %v1051
    %1168 = vst.msk [vmem:[%s6 + $0x58] sm:$0xff] %vm64, %v1053
    %1169 = vst [vmem:[%s6 + $0x60] sm:$0xff] %v1057
    %1170 = vst.msk [vmem:[%s6 + $0x68] sm:$0xff] %vm64, %v1059
    %1171 = vst [vmem:[%s6 + $0x70] sm:$0xff] %v1063
    %1172 = vst.msk [vmem:[%s6 + $0x78] sm:$0xff] %vm64, %v1065
    %1173 = vst [vmem:[%s6 + $0x80] sm:$0xff] %v1069
    %1174 = vst.msk [vmem:[%s6 + $0x88] sm:$0xff] %vm64, %v1071
    %1175 = vst [vmem:[%s6 + $0x90] sm:$0xff] %v1075
    %1176 = vst.msk [vmem:[%s6 + $0x98] sm:$0xff] %vm64, %v1077
    %1177 = vst [vmem:[%s6 + $0xa0] sm:$0xff] %v1081
    %1178 = vst.msk [vmem:[%s6 + $0xa8] sm:$0xff] %vm64, %v1083
    %1179 = vst [vmem:[%s6 + $0xb0] sm:$0xff] %v1087
    %1180 = vst.msk [vmem:[%s6 + $0xb8] sm:$0xff] %vm64, %v1089
    %1181 = vst [vmem:[%s6 + $0xc0] sm:$0xff] %v1093
    %1182 = vst.msk [vmem:[%s6 + $0xc8] sm:$0xff] %vm64, %v1095
    %1183 = vst [vmem:[%s6 + $0xd0] sm:$0xff] %v1099
    %1184 = vst.msk [vmem:[%s6 + $0xd8] sm:$0xff] %vm64, %v1101
    %1185 = vst [vmem:[%s6 + $0xe0] sm:$0xff] %v1105
    %1186 = vst.msk [vmem:[%s6 + $0xe8] sm:$0xff] %vm64, %v1107
    %1187 = vst [vmem:[%s6 + $0xf0] sm:$0xff] %v1111
    %1188 = vst.msk [vmem:[%s6 + $0xf8] sm:$0xff] %vm64, %v1113
    %1189 = vst [vmem:[%s6 + $0x100] sm:$0xff] %v1117
    %1190 = vst.msk [vmem:[%s6 + $0x108] sm:$0xff] %vm64, %v1119
    %1191 = vst [vmem:[%s6 + $0x110] sm:$0xff] %v1123
    %1192 = vst.msk [vmem:[%s6 + $0x118] sm:$0xff] %vm64, %v1125
    %1193 = vst [vmem:[%s6 + $0x120] sm:$0xff] %v1129
    %1194 = vst.msk [vmem:[%s6 + $0x128] sm:$0xff] %vm64, %v1131
    %1195 = vst [vmem:[%s6 + $0x130] sm:$0xff] %v1135
    %1196 = vst.msk [vmem:[%s6 + $0x138] sm:$0xff] %vm64, %v1137
    %1197 = vst [vmem:[%s6 + $0x140] sm:$0xff] %v1141
    %1198 = vst.msk [vmem:[%s6 + $0x148] sm:$0xff] %vm64, %v1143
    %1199 = vst [vmem:[%s6 + $0x150] sm:$0xff] %v1147
    %1200 = vst.msk [vmem:[%s6 + $0x158] sm:$0xff] %vm64, %v1149
    %1201 = vst [vmem:[%s6 + $0x160] sm:$0xf] %v1153
    %vm1202 = vcmask 257024
    %1203 = vst.msk [vmem:[%s6 + $0x168] sm:$0xf] %vm1202, %v1155
    %s1204 = scalar_lea.vmem %s4, 128
    %v1205 = vld [vmem:[%s1204] sm:$0xff]
    %v1206 = vld [vmem:[%s1204 + $0x8] sm:$0xff]
    %v1207 = vld [vmem:[%s1204 + $0x10] sm:$0xff]
    %v1208 = vld [vmem:[%s1204 + $0x18] sm:$0xff]
    %v1209 = vld [vmem:[%s1204 + $0x20] sm:$0xff]
    %v1210 = vld [vmem:[%s1204 + $0x28] sm:$0xff]
    %v1211 = vld [vmem:[%s1204 + $0x30] sm:$0xff]
    %v1212 = vld [vmem:[%s1204 + $0x38] sm:$0xff]
    %v1213 = vld [vmem:[%s1204 + $0x40] sm:$0xff]
    %v1214 = vld [vmem:[%s1204 + $0x48] sm:$0xff]
    %v1215 = vld [vmem:[%s1204 + $0x50] sm:$0xff]
    %v1216 = vld [vmem:[%s1204 + $0x58] sm:$0xff]
    %v1217 = vld [vmem:[%s1204 + $0x60] sm:$0xff]
    %v1218 = vld [vmem:[%s1204 + $0x68] sm:$0xff]
    %v1219 = vld [vmem:[%s1204 + $0x70] sm:$0xff]
    %v1220 = vld [vmem:[%s1204 + $0x78] sm:$0xff]
    %s1221 = scalar_lea.vmem [#allocation2], 64
    %v1222 = vld [vmem:[%s1221] sm:$0xff]
    %v1223 = vld [vmem:[%s1221 + $0x8] sm:$0xff]
    %v1224 = vld [vmem:[%s1221 + $0x10] sm:$0xff]
    %v1225 = vld [vmem:[%s1221 + $0x18] sm:$0xff]
    %v1226 = vld [vmem:[%s1221 + $0x20] sm:$0xff]
    %v1227 = vld [vmem:[%s1221 + $0x28] sm:$0xff]
    %v1228 = vld [vmem:[%s1221 + $0x30] sm:$0xff]
    %v1229 = vld [vmem:[%s1221 + $0x38] sm:$0xff]
    %1230 = vmatprep.subr.mxu0 0.0
    %1231 = vmatpush1.msra.mxu0 0.0
    %1232 = vmatprep.subr.mxu0 0.0
    %1233 = vmatpush1.msra.mxu0 0.0
    %1234 = vmatprep.subr.mxu0 0.0
    %1235 = vmatpush1.msra.mxu0 0.0
    %1236 = vmatprep.subr.mxu0 0.0
    %1237 = vmatpush1.msra.mxu0 0.0
    %1238 = vmatprep.subr.mxu0 0.0
    %1239 = vmatpush1.msra.mxu0 0.0
    %1240 = vmatprep.subr.mxu0 0.0
    %1241 = vmatpush1.msra.mxu0 0.0
    %1242 = vmatprep.subr.mxu0 0.0
    %1243 = vmatpush1.msra.mxu0 0.0
    %1244 = vmatprep.subr.mxu0 0.0
    %1245 = vmatpush1.msra.mxu0 0.0
    %1246 = vmatprep.subr.mxu0 0.0
    %1247 = vmatpush1.msra.mxu0 0.0
    %1248 = vmatprep.subr.mxu0 0.0
    %1249 = vmatpush1.msra.mxu0 0.0
    %1250 = vmatprep.subr.mxu0 0.0
    %1251 = vmatpush1.msra.mxu0 0.0
    %1252 = vmatprep.subr.mxu0 0.0
    %1253 = vmatpush1.msra.mxu0 0.0
    %1254 = vmatprep.subr.mxu0 %v1229
    %1255 = vmatpush1.msra.mxu0 %v1228
    %1256 = vmatprep.subr.mxu0 %v1227
    %1257 = vmatpush1.msra.mxu0 %v1226
    %1258 = vmatprep.subr.mxu0 %v1225
    %1259 = vmatpush1.msra.mxu0 %v1224
    %1260 = vmatprep.subr.mxu0 %v1223
    %1261 = vmatpush1.msra.mxu0 %v1222
    %1262 = vmatprep.subr.mxu0 0.0
    %1263 = vmatpush2.msra.mxu0 0.0
    %1264 = vmatprep.subr.mxu0 0.0
    %1265 = vmatpush2.msra.mxu0 0.0
    %1266 = vmatprep.subr.mxu0 0.0
    %1267 = vmatpush2.msra.mxu0 0.0
    %1268 = vmatprep.subr.mxu0 0.0
    %1269 = vmatpush2.msra.mxu0 0.0
    %1270 = vmatprep.subr.mxu0 0.0
    %1271 = vmatpush2.msra.mxu0 0.0
    %1272 = vmatprep.subr.mxu0 0.0
    %1273 = vmatpush2.msra.mxu0 0.0
    %1274 = vmatprep.subr.mxu0 0.0
    %1275 = vmatpush2.msra.mxu0 0.0
    %1276 = vmatprep.subr.mxu0 0.0
    %1277 = vmatpush2.msra.mxu0 0.0
    %1278 = vmatprep.subr.mxu0 0.0
    %1279 = vmatpush2.msra.mxu0 0.0
    %1280 = vmatprep.subr.mxu0 0.0
    %1281 = vmatpush2.msra.mxu0 0.0
    %1282 = vmatprep.subr.mxu0 0.0
    %1283 = vmatpush2.msra.mxu0 0.0
    %1284 = vmatprep.subr.mxu0 0.0
    %1285 = vmatpush2.msra.mxu0 0.0
    %1286 = vmatprep.subr.mxu0 0.0
    %1287 = vmatpush2.msra.mxu0 0.0
    %1288 = vmatprep.subr.mxu0 0.0
    %1289 = vmatpush2.msra.mxu0 0.0
    %1290 = vmatprep.subr.mxu0 0.0
    %1291 = vmatpush2.msra.mxu0 0.0
    %1292 = vmatprep.subr.mxu0 0.0
    %1293 = vmatpush2.msra.mxu0 0.0
    %1294 = vmatprep.mubr.f32.mxu0 0.0
    %1295 = vmatmul.mubr.f32.gmra.mxu0 %v613
    %v1296 = vpop.f32.mrf.mxu0
    %v1297 = vadd.f32 0.0, %v1296
    %v1298 = vpop.f32.mrf.mxu0
    %v1299 = vadd.f32 0.0, %v1298
    %1300 = vmatprep.mubr.f32.mxu0 0.0
    %1301 = vmatmul.mubr.f32.gmra.mxu0 %v616
    %v1302 = vpop.f32.mrf.mxu0
    %v1303 = vadd.f32 0.0, %v1302
    %v1304 = vpop.f32.mrf.mxu0
    %v1305 = vadd.f32 0.0, %v1304
    %1306 = vmatprep.mubr.f32.mxu0 0.0
    %1307 = vmatmul.mubr.f32.gmra.mxu0 %v619
    %v1308 = vpop.f32.mrf.mxu0
    %v1309 = vadd.f32 0.0, %v1308
    %v1310 = vpop.f32.mrf.mxu0
    %v1311 = vadd.f32 0.0, %v1310
    %1312 = vmatprep.mubr.f32.mxu0 0.0
    %1313 = vmatmul.mubr.f32.gmra.mxu0 %v622
    %v1314 = vpop.f32.mrf.mxu0
    %v1315 = vadd.f32 0.0, %v1314
    %v1316 = vpop.f32.mrf.mxu0
    %v1317 = vadd.f32 0.0, %v1316
    %1318 = vmatprep.mubr.f32.mxu0 0.0
    %1319 = vmatmul.mubr.f32.gmra.mxu0 %v625
    %v1320 = vpop.f32.mrf.mxu0
    %v1321 = vadd.f32 0.0, %v1320
    %v1322 = vpop.f32.mrf.mxu0
    %v1323 = vadd.f32 0.0, %v1322
    %1324 = vmatprep.mubr.f32.mxu0 0.0
    %1325 = vmatmul.mubr.f32.gmra.mxu0 %v628
    %v1326 = vpop.f32.mrf.mxu0
    %v1327 = vadd.f32 0.0, %v1326
    %v1328 = vpop.f32.mrf.mxu0
    %v1329 = vadd.f32 0.0, %v1328
    %1330 = vmatprep.mubr.f32.mxu0 0.0
    %1331 = vmatmul.mubr.f32.gmra.mxu0 %v631
    %v1332 = vpop.f32.mrf.mxu0
    %v1333 = vadd.f32 0.0, %v1332
    %v1334 = vpop.f32.mrf.mxu0
    %v1335 = vadd.f32 0.0, %v1334
    %1336 = vmatprep.mubr.f32.mxu0 0.0
    %1337 = vmatmul.mubr.f32.gmra.mxu0 %v634
    %v1338 = vpop.f32.mrf.mxu0
    %v1339 = vadd.f32 0.0, %v1338
    %v1340 = vpop.f32.mrf.mxu0
    %v1341 = vadd.f32 0.0, %v1340
    %1342 = vmatprep.mubr.f32.mxu0 0.0
    %1343 = vmatmul.mubr.f32.gmra.mxu0 %v637
    %v1344 = vpop.f32.mrf.mxu0
    %v1345 = vadd.f32 0.0, %v1344
    %v1346 = vpop.f32.mrf.mxu0
    %v1347 = vadd.f32 0.0, %v1346
    %1348 = vmatprep.mubr.f32.mxu0 0.0
    %1349 = vmatmul.mubr.f32.gmra.mxu0 %v640
    %v1350 = vpop.f32.mrf.mxu0
    %v1351 = vadd.f32 0.0, %v1350
    %v1352 = vpop.f32.mrf.mxu0
    %v1353 = vadd.f32 0.0, %v1352
    %1354 = vmatprep.mubr.f32.mxu0 0.0
    %1355 = vmatmul.mubr.f32.gmra.mxu0 %v643
    %v1356 = vpop.f32.mrf.mxu0
    %v1357 = vadd.f32 0.0, %v1356
    %v1358 = vpop.f32.mrf.mxu0
    %v1359 = vadd.f32 0.0, %v1358
    %1360 = vmatprep.mubr.f32.mxu0 0.0
    %1361 = vmatmul.mubr.f32.gmra.mxu0 %v646
    %v1362 = vpop.f32.mrf.mxu0
    %v1363 = vadd.f32 0.0, %v1362
    %v1364 = vpop.f32.mrf.mxu0
    %v1365 = vadd.f32 0.0, %v1364
    %1366 = vmatprep.mubr.f32.mxu0 0.0
    %1367 = vmatmul.mubr.f32.gmra.mxu0 %v649
    %v1368 = vpop.f32.mrf.mxu0
    %v1369 = vadd.f32 0.0, %v1368
    %v1370 = vpop.f32.mrf.mxu0
    %v1371 = vadd.f32 0.0, %v1370
    %1372 = vmatprep.mubr.f32.mxu0 0.0
    %1373 = vmatmul.mubr.f32.gmra.mxu0 %v652
    %v1374 = vpop.f32.mrf.mxu0
    %v1375 = vadd.f32 0.0, %v1374
    %v1376 = vpop.f32.mrf.mxu0
    %v1377 = vadd.f32 0.0, %v1376
    %1378 = vmatprep.mubr.f32.mxu0 0.0
    %1379 = vmatmul.mubr.f32.gmra.mxu0 %v655
    %v1380 = vpop.f32.mrf.mxu0
    %v1381 = vadd.f32 0.0, %v1380
    %v1382 = vpop.f32.mrf.mxu0
    %v1383 = vadd.f32 0.0, %v1382
    %1384 = vmatprep.mubr.f32.mxu0 0.0
    %1385 = vmatmul.mubr.f32.gmra.mxu0 %v658
    %v1386 = vpop.f32.mrf.mxu0
    %v1387 = vadd.f32 0.0, %v1386
    %v1388 = vpop.f32.mrf.mxu0
    %v1389 = vadd.f32 0.0, %v1388
    %1390 = vmatprep.mubr.f32.mxu0 0.0
    %1391 = vmatmul.mubr.f32.gmra.mxu0 %v661
    %v1392 = vpop.f32.mrf.mxu0
    %v1393 = vadd.f32 0.0, %v1392
    %v1394 = vpop.f32.mrf.mxu0
    %v1395 = vadd.f32 0.0, %v1394
    %1396 = vmatprep.mubr.f32.mxu0 0.0
    %1397 = vmatmul.mubr.f32.gmra.mxu0 %v664
    %v1398 = vpop.f32.mrf.mxu0
    %v1399 = vadd.f32 0.0, %v1398
    %v1400 = vpop.f32.mrf.mxu0
    %v1401 = vadd.f32 0.0, %v1400
    %1402 = vmatprep.mubr.f32.mxu0 0.0
    %1403 = vmatmul.mubr.f32.gmra.mxu0 %v667
    %v1404 = vpop.f32.mrf.mxu0
    %v1405 = vadd.f32 0.0, %v1404
    %v1406 = vpop.f32.mrf.mxu0
    %v1407 = vadd.f32 0.0, %v1406
    %1408 = vmatprep.mubr.f32.mxu0 0.0
    %1409 = vmatmul.mubr.f32.gmra.mxu0 %v670
    %v1410 = vpop.f32.mrf.mxu0
    %v1411 = vadd.f32 0.0, %v1410
    %v1412 = vpop.f32.mrf.mxu0
    %v1413 = vadd.f32 0.0, %v1412
    %1414 = vmatprep.mubr.f32.mxu0 0.0
    %1415 = vmatmul.mubr.f32.gmra.mxu0 %v673
    %v1416 = vpop.f32.mrf.mxu0
    %v1417 = vadd.f32 0.0, %v1416
    %v1418 = vpop.f32.mrf.mxu0
    %v1419 = vadd.f32 0.0, %v1418
    %1420 = vmatprep.mubr.f32.mxu0 0.0
    %1421 = vmatmul.mubr.f32.gmra.mxu0 %v676
    %v1422 = vpop.f32.mrf.mxu0
    %v1423 = vadd.f32 0.0, %v1422
    %v1424 = vpop.f32.mrf.mxu0
    %v1425 = vadd.f32 0.0, %v1424
    %1426 = vmatprep.mubr.f32.mxu0 0.0
    %1427 = vmatmul.mubr.f32.gmra.mxu0 %v679
    %v1428 = vpop.f32.mrf.mxu0
    %v1429 = vadd.f32 0.0, %v1428
    %v1430 = vpop.f32.mrf.mxu0
    %v1431 = vadd.f32 0.0, %v1430
    %1432 = vdwg.mxu0
    %1433 = vmatprep.subr.mxu0 0.0
    %1434 = vmatpush1.msra.mxu0 0.0
    %1435 = vmatprep.subr.mxu0 0.0
    %1436 = vmatpush1.msra.mxu0 0.0
    %1437 = vmatprep.subr.mxu0 0.0
    %1438 = vmatpush1.msra.mxu0 0.0
    %1439 = vmatprep.subr.mxu0 0.0
    %1440 = vmatpush1.msra.mxu0 0.0
    %1441 = vmatprep.subr.mxu0 0.0
    %1442 = vmatpush1.msra.mxu0 0.0
    %1443 = vmatprep.subr.mxu0 0.0
    %1444 = vmatpush1.msra.mxu0 0.0
    %1445 = vmatprep.subr.mxu0 0.0
    %1446 = vmatpush1.msra.mxu0 0.0
    %1447 = vmatprep.subr.mxu0 0.0
    %1448 = vmatpush1.msra.mxu0 0.0
    %1449 = vmatprep.subr.mxu0 %v1220
    %1450 = vmatpush1.msra.mxu0 %v1219
    %1451 = vmatprep.subr.mxu0 %v1218
    %1452 = vmatpush1.msra.mxu0 %v1217
    %1453 = vmatprep.subr.mxu0 %v1216
    %1454 = vmatpush1.msra.mxu0 %v1215
    %1455 = vmatprep.subr.mxu0 %v1214
    %1456 = vmatpush1.msra.mxu0 %v1213
    %1457 = vmatprep.subr.mxu0 %v1212
    %1458 = vmatpush1.msra.mxu0 %v1211
    %1459 = vmatprep.subr.mxu0 %v1210
    %1460 = vmatpush1.msra.mxu0 %v1209
    %1461 = vmatprep.subr.mxu0 %v1208
    %1462 = vmatpush1.msra.mxu0 %v1207
    %1463 = vmatprep.subr.mxu0 %v1206
    %1464 = vmatpush1.msra.mxu0 %v1205
    %1465 = vmatprep.subr.mxu0 0.0
    %1466 = vmatpush2.msra.mxu0 0.0
    %1467 = vmatprep.subr.mxu0 0.0
    %1468 = vmatpush2.msra.mxu0 0.0
    %1469 = vmatprep.subr.mxu0 0.0
    %1470 = vmatpush2.msra.mxu0 0.0
    %1471 = vmatprep.subr.mxu0 0.0
    %1472 = vmatpush2.msra.mxu0 0.0
    %1473 = vmatprep.subr.mxu0 0.0
    %1474 = vmatpush2.msra.mxu0 0.0
    %1475 = vmatprep.subr.mxu0 0.0
    %1476 = vmatpush2.msra.mxu0 0.0
    %1477 = vmatprep.subr.mxu0 0.0
    %1478 = vmatpush2.msra.mxu0 0.0
    %1479 = vmatprep.subr.mxu0 0.0
    %1480 = vmatpush2.msra.mxu0 0.0
    %1481 = vmatprep.subr.mxu0 0.0
    %1482 = vmatpush2.msra.mxu0 0.0
    %1483 = vmatprep.subr.mxu0 0.0
    %1484 = vmatpush2.msra.mxu0 0.0
    %1485 = vmatprep.subr.mxu0 0.0
    %1486 = vmatpush2.msra.mxu0 0.0
    %1487 = vmatprep.subr.mxu0 0.0
    %1488 = vmatpush2.msra.mxu0 0.0
    %1489 = vmatprep.subr.mxu0 0.0
    %1490 = vmatpush2.msra.mxu0 0.0
    %1491 = vmatprep.subr.mxu0 0.0
    %1492 = vmatpush2.msra.mxu0 0.0
    %1493 = vmatprep.subr.mxu0 0.0
    %1494 = vmatpush2.msra.mxu0 0.0
    %1495 = vmatprep.subr.mxu0 0.0
    %1496 = vmatpush2.msra.mxu0 0.0
    %1497 = vmatprep.mubr.f32.mxu0 0.0
    %1498 = vmatmul.mubr.f32.gmra.mxu0 %v886
    %v1499 = vpop.f32.mrf.mxu0
    %v1500 = vadd.f32 %v1297, %v1499
    %v1501 = vpop.f32.mrf.mxu0
    %v1502 = vadd.f32 %v1299, %v1501
    %1503 = vmatprep.mubr.f32.mxu0 0.0
    %1504 = vmatmul.mubr.f32.gmra.mxu0 %v889
    %v1505 = vpop.f32.mrf.mxu0
    %v1506 = vadd.f32 %v1303, %v1505
    %v1507 = vpop.f32.mrf.mxu0
    %v1508 = vadd.f32 %v1305, %v1507
    %1509 = vmatprep.mubr.f32.mxu0 0.0
    %1510 = vmatmul.mubr.f32.gmra.mxu0 %v892
    %v1511 = vpop.f32.mrf.mxu0
    %v1512 = vadd.f32 %v1309, %v1511
    %v1513 = vpop.f32.mrf.mxu0
    %v1514 = vadd.f32 %v1311, %v1513
    %1515 = vmatprep.mubr.f32.mxu0 0.0
    %1516 = vmatmul.mubr.f32.gmra.mxu0 %v895
    %v1517 = vpop.f32.mrf.mxu0
    %v1518 = vadd.f32 %v1315, %v1517
    %v1519 = vpop.f32.mrf.mxu0
    %v1520 = vadd.f32 %v1317, %v1519
    %1521 = vmatprep.mubr.f32.mxu0 0.0
    %1522 = vmatmul.mubr.f32.gmra.mxu0 %v898
    %v1523 = vpop.f32.mrf.mxu0
    %v1524 = vadd.f32 %v1321, %v1523
    %v1525 = vpop.f32.mrf.mxu0
    %v1526 = vadd.f32 %v1323, %v1525
    %1527 = vmatprep.mubr.f32.mxu0 0.0
    %1528 = vmatmul.mubr.f32.gmra.mxu0 %v901
    %v1529 = vpop.f32.mrf.mxu0
    %v1530 = vadd.f32 %v1327, %v1529
    %v1531 = vpop.f32.mrf.mxu0
    %v1532 = vadd.f32 %v1329, %v1531
    %1533 = vmatprep.mubr.f32.mxu0 0.0
    %1534 = vmatmul.mubr.f32.gmra.mxu0 %v904
    %v1535 = vpop.f32.mrf.mxu0
    %v1536 = vadd.f32 %v1333, %v1535
    %v1537 = vpop.f32.mrf.mxu0
    %v1538 = vadd.f32 %v1335, %v1537
    %1539 = vmatprep.mubr.f32.mxu0 0.0
    %1540 = vmatmul.mubr.f32.gmra.mxu0 %v907
    %v1541 = vpop.f32.mrf.mxu0
    %v1542 = vadd.f32 %v1339, %v1541
    %v1543 = vpop.f32.mrf.mxu0
    %v1544 = vadd.f32 %v1341, %v1543
    %1545 = vmatprep.mubr.f32.mxu0 0.0
    %1546 = vmatmul.mubr.f32.gmra.mxu0 %v910
    %v1547 = vpop.f32.mrf.mxu0
    %v1548 = vadd.f32 %v1345, %v1547
    %v1549 = vpop.f32.mrf.mxu0
    %v1550 = vadd.f32 %v1347, %v1549
    %1551 = vmatprep.mubr.f32.mxu0 0.0
    %1552 = vmatmul.mubr.f32.gmra.mxu0 %v913
    %v1553 = vpop.f32.mrf.mxu0
    %v1554 = vadd.f32 %v1351, %v1553
    %v1555 = vpop.f32.mrf.mxu0
    %v1556 = vadd.f32 %v1353, %v1555
    %1557 = vmatprep.mubr.f32.mxu0 0.0
    %1558 = vmatmul.mubr.f32.gmra.mxu0 %v916
    %v1559 = vpop.f32.mrf.mxu0
    %v1560 = vadd.f32 %v1357, %v1559
    %v1561 = vpop.f32.mrf.mxu0
    %v1562 = vadd.f32 %v1359, %v1561
    %1563 = vmatprep.mubr.f32.mxu0 0.0
    %1564 = vmatmul.mubr.f32.gmra.mxu0 %v919
    %v1565 = vpop.f32.mrf.mxu0
    %v1566 = vadd.f32 %v1363, %v1565
    %v1567 = vpop.f32.mrf.mxu0
    %v1568 = vadd.f32 %v1365, %v1567
    %1569 = vmatprep.mubr.f32.mxu0 0.0
    %1570 = vmatmul.mubr.f32.gmra.mxu0 %v922
    %v1571 = vpop.f32.mrf.mxu0
    %v1572 = vadd.f32 %v1369, %v1571
    %v1573 = vpop.f32.mrf.mxu0
    %v1574 = vadd.f32 %v1371, %v1573
    %1575 = vmatprep.mubr.f32.mxu0 0.0
    %1576 = vmatmul.mubr.f32.gmra.mxu0 %v925
    %v1577 = vpop.f32.mrf.mxu0
    %v1578 = vadd.f32 %v1375, %v1577
    %v1579 = vpop.f32.mrf.mxu0
    %v1580 = vadd.f32 %v1377, %v1579
    %1581 = vmatprep.mubr.f32.mxu0 0.0
    %1582 = vmatmul.mubr.f32.gmra.mxu0 %v928
    %v1583 = vpop.f32.mrf.mxu0
    %v1584 = vadd.f32 %v1381, %v1583
    %v1585 = vpop.f32.mrf.mxu0
    %v1586 = vadd.f32 %v1383, %v1585
    %1587 = vmatprep.mubr.f32.mxu0 0.0
    %1588 = vmatmul.mubr.f32.gmra.mxu0 %v931
    %v1589 = vpop.f32.mrf.mxu0
    %v1590 = vadd.f32 %v1387, %v1589
    %v1591 = vpop.f32.mrf.mxu0
    %v1592 = vadd.f32 %v1389, %v1591
    %1593 = vmatprep.mubr.f32.mxu0 0.0
    %1594 = vmatmul.mubr.f32.gmra.mxu0 %v934
    %v1595 = vpop.f32.mrf.mxu0
    %v1596 = vadd.f32 %v1393, %v1595
    %v1597 = vpop.f32.mrf.mxu0
    %v1598 = vadd.f32 %v1395, %v1597
    %1599 = vmatprep.mubr.f32.mxu0 0.0
    %1600 = vmatmul.mubr.f32.gmra.mxu0 %v937
    %v1601 = vpop.f32.mrf.mxu0
    %v1602 = vadd.f32 %v1399, %v1601
    %v1603 = vpop.f32.mrf.mxu0
    %v1604 = vadd.f32 %v1401, %v1603
    %1605 = vmatprep.mubr.f32.mxu0 0.0
    %1606 = vmatmul.mubr.f32.gmra.mxu0 %v940
    %v1607 = vpop.f32.mrf.mxu0
    %v1608 = vadd.f32 %v1405, %v1607
    %v1609 = vpop.f32.mrf.mxu0
    %v1610 = vadd.f32 %v1407, %v1609
    %1611 = vmatprep.mubr.f32.mxu0 0.0
    %1612 = vmatmul.mubr.f32.gmra.mxu0 %v943
    %v1613 = vpop.f32.mrf.mxu0
    %v1614 = vadd.f32 %v1411, %v1613
    %v1615 = vpop.f32.mrf.mxu0
    %v1616 = vadd.f32 %v1413, %v1615
    %1617 = vmatprep.mubr.f32.mxu0 0.0
    %1618 = vmatmul.mubr.f32.gmra.mxu0 %v946
    %v1619 = vpop.f32.mrf.mxu0
    %v1620 = vadd.f32 %v1417, %v1619
    %v1621 = vpop.f32.mrf.mxu0
    %v1622 = vadd.f32 %v1419, %v1621
    %1623 = vmatprep.mubr.f32.mxu0 0.0
    %1624 = vmatmul.mubr.f32.gmra.mxu0 %v949
    %v1625 = vpop.f32.mrf.mxu0
    %v1626 = vadd.f32 %v1423, %v1625
    %v1627 = vpop.f32.mrf.mxu0
    %v1628 = vadd.f32 %v1425, %v1627
    %1629 = vmatprep.mubr.f32.mxu0 0.0
    %1630 = vmatmul.mubr.f32.gmra.mxu0 %v952
    %v1631 = vpop.f32.mrf.mxu0
    %v1632 = vadd.f32 %v1429, %v1631
    %v1633 = vpop.f32.mrf.mxu0
    %v1634 = vadd.f32 %v1431, %v1633
    %1635 = vdwg.mxu0
    %s1636 = scalar_lea.vmem %s6, 368
    %1637 = vst [vmem:[%s1636] sm:$0xff] %v1500
    %1638 = vst.msk [vmem:[%s1636 + $0x8] sm:$0xff] %vm64, %v1502
    %1639 = vst [vmem:[%s1636 + $0x10] sm:$0xff] %v1506
    %1640 = vst.msk [vmem:[%s1636 + $0x18] sm:$0xff] %vm64, %v1508
    %1641 = vst [vmem:[%s1636 + $0x20] sm:$0xff] %v1512
    %1642 = vst.msk [vmem:[%s1636 + $0x28] sm:$0xff] %vm64, %v1514
    %1643 = vst [vmem:[%s1636 + $0x30] sm:$0xff] %v1518
    %1644 = vst.msk [vmem:[%s1636 + $0x38] sm:$0xff] %vm64, %v1520
    %1645 = vst [vmem:[%s1636 + $0x40] sm:$0xff] %v1524
    %1646 = vst.msk [vmem:[%s1636 + $0x48] sm:$0xff] %vm64, %v1526
    %1647 = vst [vmem:[%s1636 + $0x50] sm:$0xff] %v1530
    %1648 = vst.msk [vmem:[%s1636 + $0x58] sm:$0xff] %vm64, %v1532
    %1649 = vst [vmem:[%s1636 + $0x60] sm:$0xff] %v1536
    %1650 = vst.msk [vmem:[%s1636 + $0x68] sm:$0xff] %vm64, %v1538
    %1651 = vst [vmem:[%s1636 + $0x70] sm:$0xff] %v1542
    %1652 = vst.msk [vmem:[%s1636 + $0x78] sm:$0xff] %vm64, %v1544
    %1653 = vst [vmem:[%s1636 + $0x80] sm:$0xff] %v1548
    %1654 = vst.msk [vmem:[%s1636 + $0x88] sm:$0xff] %vm64, %v1550
    %1655 = vst [vmem:[%s1636 + $0x90] sm:$0xff] %v1554
    %1656 = vst.msk [vmem:[%s1636 + $0x98] sm:$0xff] %vm64, %v1556
    %1657 = vst [vmem:[%s1636 + $0xa0] sm:$0xff] %v1560
    %1658 = vst.msk [vmem:[%s1636 + $0xa8] sm:$0xff] %vm64, %v1562
    %1659 = vst [vmem:[%s1636 + $0xb0] sm:$0xff] %v1566
    %1660 = vst.msk [vmem:[%s1636 + $0xb8] sm:$0xff] %vm64, %v1568
    %1661 = vst [vmem:[%s1636 + $0xc0] sm:$0xff] %v1572
    %1662 = vst.msk [vmem:[%s1636 + $0xc8] sm:$0xff] %vm64, %v1574
    %1663 = vst [vmem:[%s1636 + $0xd0] sm:$0xff] %v1578
    %1664 = vst.msk [vmem:[%s1636 + $0xd8] sm:$0xff] %vm64, %v1580
    %1665 = vst [vmem:[%s1636 + $0xe0] sm:$0xff] %v1584
    %1666 = vst.msk [vmem:[%s1636 + $0xe8] sm:$0xff] %vm64, %v1586
    %1667 = vst [vmem:[%s1636 + $0xf0] sm:$0xff] %v1590
    %1668 = vst.msk [vmem:[%s1636 + $0xf8] sm:$0xff] %vm64, %v1592
    %1669 = vst [vmem:[%s1636 + $0x100] sm:$0xff] %v1596
    %1670 = vst.msk [vmem:[%s1636 + $0x108] sm:$0xff] %vm64, %v1598
    %1671 = vst [vmem:[%s1636 + $0x110] sm:$0xff] %v1602
    %1672 = vst.msk [vmem:[%s1636 + $0x118] sm:$0xff] %vm64, %v1604
    %1673 = vst [vmem:[%s1636 + $0x120] sm:$0xff] %v1608
    %1674 = vst.msk [vmem:[%s1636 + $0x128] sm:$0xff] %vm64, %v1610
    %1675 = vst [vmem:[%s1636 + $0x130] sm:$0xff] %v1614
    %1676 = vst.msk [vmem:[%s1636 + $0x138] sm:$0xff] %vm64, %v1616
    %1677 = vst [vmem:[%s1636 + $0x140] sm:$0xff] %v1620
    %1678 = vst.msk [vmem:[%s1636 + $0x148] sm:$0xff] %vm64, %v1622
    %1679 = vst [vmem:[%s1636 + $0x150] sm:$0xff] %v1626
    %1680 = vst.msk [vmem:[%s1636 + $0x158] sm:$0xff] %vm64, %v1628
    %1681 = vst [vmem:[%s1636 + $0x160] sm:$0xf] %v1632
    %1682 = vst.msk [vmem:[%s1636 + $0x168] sm:$0xf] %vm1202, %v1634
    // Predicated region
    $region30: #{hinerv_encoding_forward.2} parent=1 // pred_check
      _
    $region31: #{hinerv_encoding_forward.2} parent=1 // pred_check_branch
      %1684 = sbr.rel (0) target = $region33
    $region32: #{hinerv_encoding_forward.2} parent=1 // pred_region
      _
    $region33: #{hinerv_encoding_forward.2} parent=1 // pred_fallthru
      _
    // Predicated region
    $region34: #{hinerv_encoding_forward.2} parent=1 // pred_check
      _
    $region35: #{hinerv_encoding_forward.2} parent=1 // pred_check_branch
      %1686 = sbr.rel (0) target = $region37
    $region36: #{hinerv_encoding_forward.2} parent=1 // pred_region
      _
    $region37: #{hinerv_encoding_forward.2} parent=1 // pred_fallthru
      _
    %1687 = vsyncpa [#allocation3], 1

</llo_original>
